<compile_context>
chip_gen: v5e
topology: v5e:2x2
jax: 0.10.0
libtpu: 0.0.40
codegen_flags: <defaults>
</compile_context>

<pallas_src>
import numpy as np
import jax
import jax.numpy as jnp
from jax import lax
from jax.experimental import pallas as pl
from jax.experimental.pallas import tpu as pltpu

# ----------------------- static model dimensions ------------------------------
IMG_SIZE = 28
BATCH = 2
K = 5
C1, C2 = 6, 12
H1 = IMG_SIZE - (K - 1)          # 24  conv1 spatial
P1 = H1 // 2                     # 12  pool1 spatial
H2 = P1 - (K - 1)                # 8   conv2 spatial
P2 = H2 // 2                     # 4   pool2 spatial (== conv2_size)

XW1 = BATCH * IMG_SIZE           # 56   input width      (col = b*28 + w)
C1W = C1 * BATCH * H1            # 288  conv1 acc width   (col = co*48 + b*24 + w)
S1C = C1 * BATCH * P1            # 144  pooled1 width     (col = co*24 + b*12 + u)
C2W = C2 * BATCH * H2            # 192  conv2 acc width   (col = co*16 + b*8  + w)
F4C = C2 * BATCH * P2            # 96   pooled2 width     (col = co*8  + b*4  + v)
FC_IN = P2 * F4C                 # 384  fc1 input size
NHID1, NHID2, NOUT = 100, 50, 2
BIAS_W = S1C                     # 144  packed-bias row width


# ------------------------------- kernel ---------------------------------------
def fused_kernel(x_ref, band1_ref, band2_ref, rsel1_ref, csel1_ref,
                 rsel2_ref, csel2_ref, bias_ref, fw1_ref, fw2_ref, fw3_ref,
                 o_ref, s1_ref):
    f32 = jnp.float32

    def mm(a, b):
        return jnp.dot(a, b, preferred_element_type=f32)

    # -------- conv1 (1 -> 6 ch, 5x5 VALID) as 5 banded MXU matmuls ------------
    # acc1[h, co*48 + b*24 + w]  (only valid entries are ever produced)
    d1 = [mm(x_ref[pl.ds(kh, H1), :], band1_ref[kh]) for kh in range(K)]
    acc1 = ((d1[0] + d1[1]) + (d1[2] + d1[3])) + d1[4]                # (24, 288)

    # -------- pool1 (2x2 max) via selection matmuls, then bias + relu ---------
    hmax1 = jnp.maximum(mm(rsel1_ref[0], acc1), mm(rsel1_ref[1], acc1))   # (12, 288)
    pool1 = jnp.maximum(mm(hmax1, csel1_ref[0]), mm(hmax1, csel1_ref[1])) # (12, 144)
    s1_ref[...] = jnp.maximum(pool1 + bias_ref[0:1, 0:S1C], 0.0)

    # -------- conv2 (6 -> 12 ch, 5x5 VALID) as 5 banded MXU matmuls -----------
    # input-channel sum is folded into the 144-lane contraction
    d2 = [mm(s1_ref[pl.ds(kh, H2), :], band2_ref[kh]) for kh in range(K)]
    acc2 = ((d2[0] + d2[1]) + (d2[2] + d2[3])) + d2[4]                # (8, 192)

    # -------- pool2 (2x2 max) + bias + relu -> fc1 input ----------------------
    hmax2 = jnp.maximum(mm(rsel2_ref[0], acc2), mm(rsel2_ref[1], acc2))   # (4, 192)
    pool2 = jnp.maximum(mm(hmax2, csel2_ref[0]), mm(hmax2, csel2_ref[1])) # (4, 96)
    f4 = jnp.maximum(pool2 + bias_ref[1:2, 0:F4C], 0.0)              # (4, 96)

    # -------- fc1 -> relu -> fc2 -> relu -> fc3 -------------------------------
    # fc1: 4 independent partial dots (one per f4 row), tree-summed; fw1 rows
    # are pre-permuted so no in-kernel flatten/relayout is needed.
    parts = [mm(f4[j:j + 1, :], fw1_ref[pl.ds(j * F4C, F4C), :]) for j in range(P2)]
    h = (parts[0] + parts[1]) + (parts[2] + parts[3]) + bias_ref[2:3, 0:NHID1]
    h = jnp.maximum(h, 0.0)                                           # (1, 100)
    h = jnp.maximum(mm(h, fw2_ref[...]) + bias_ref[3:4, 0:NHID2], 0.0)  # (1, 50)
    o_ref[...] = mm(h, fw3_ref[...]) + bias_ref[4:5, 0:NOUT]          # (1, 2)


# --------------------------- parameter handling --------------------------------
def init_params(key, img_size, batch_size):
    conv2_size = int(((img_size - 4) / 2 - 4) / 2)
    fc1_in = 12 * batch_size * conv2_size ** 2
    ks = jax.random.split(key, 10)
    params = {
        "w1": 0.1 * jax.random.normal(ks[0], (6, 1, 5, 5), jnp.float32),
        "b1": 0.1 * jax.random.normal(ks[1], (6,), jnp.float32),
        "w2": 0.1 * jax.random.normal(ks[2], (12, 6, 5, 5), jnp.float32),
        "b2": 0.1 * jax.random.normal(ks[3], (12,), jnp.float32),
        "fw1": 0.05 * jax.random.normal(ks[4], (100, fc1_in), jnp.float32),
        "fb1": 0.05 * jax.random.normal(ks[5], (100,), jnp.float32),
        "fw2": 0.05 * jax.random.normal(ks[6], (50, 100), jnp.float32),
        "fb2": 0.05 * jax.random.normal(ks[7], (50,), jnp.float32),
        "fw3": 0.05 * jax.random.normal(ks[8], (2, 50), jnp.float32),
        "fb3": 0.05 * jax.random.normal(ks[9], (2,), jnp.float32),
    }
    return params, conv2_size


def prepare_params(params):
    """One-time (host-side) conversion of PyTorch-layout params into kernel
    operands: banded conv-weight matrices, pooling selection matrices, packed
    biases, and pre-permuted fc weights."""
    w1 = np.asarray(params["w1"])     # (6, 1, 5, 5)
    b1 = np.asarray(params["b1"])     # (6,)
    w2 = np.asarray(params["w2"])     # (12, 6, 5, 5)
    b2 = np.asarray(params["b2"])     # (12,)

    # conv1 bands: band1[kh][b*28 + w + kw, co*48 + b*24 + w] = w1[co,0,kh,kw]
    band1 = np.zeros((K, XW1, C1W), np.float32)
    for kh in range(K):
        for kw in range(K):
            for co in range(C1):
                for b in range(BATCH):
                    for w in range(H1):
                        band1[kh, b * IMG_SIZE + w + kw,
                              co * (BATCH * H1) + b * H1 + w] = w1[co, 0, kh, kw]

    # conv2 bands: band2[kh][ci*24 + b*12 + w + kw, co*16 + b*8 + w] = w2[co,ci,kh,kw]
    band2 = np.zeros((K, S1C, C2W), np.float32)
    for kh in range(K):
        for kw in range(K):
            for co in range(C2):
                for ci in range(C1):
                    for b in range(BATCH):
                        for w in range(H2):
                            band2[kh, ci * (BATCH * P1) + b * P1 + w + kw,
                                  co * (BATCH * H2) + b * H2 + w] = w2[co, ci, kh, kw]

    # pooling row-selection (left) matrices: pick even/odd rows
    rsel1 = np.zeros((2, P1, H1), np.float32)
    for p in range(2):
        for u in range(P1):
            rsel1[p, u, 2 * u + p] = 1.0
    rsel2 = np.zeros((2, P2, H2), np.float32)
    for p in range(2):
        for j in range(P2):
            rsel2[p, j, 2 * j + p] = 1.0

    # pooling column-selection (right) matrices: pick even/odd columns per
    # (channel, batch) block; they never select across blocks.
    csel1 = np.zeros((2, C1W, S1C), np.float32)
    for p in range(2):
        for co in range(C1):
            for b in range(BATCH):
                for u in range(P1):
                    csel1[p, co * (BATCH * H1) + b * H1 + 2 * u + p,
                          co * (BATCH * P1) + b * P1 + u] = 1.0
    csel2 = np.zeros((2, C2W, F4C), np.float32)
    for p in range(2):
        for co in range(C2):
            for b in range(BATCH):
                for v in range(P2):
                    csel2[p, co * (BATCH * H2) + b * H2 + 2 * v + p,
                          co * (BATCH * P2) + b * P2 + v] = 1.0

    # all biases packed into one (5, 144) operand (rows zero-padded on the right)
    biases = np.zeros((5, BIAS_W), np.float32)
    for co in range(C1):
        biases[0, co * (BATCH * P1):(co + 1) * (BATCH * P1)] = b1[co]
    for co in range(C2):
        biases[1, co * (BATCH * P2):(co + 1) * (BATCH * P2)] = b2[co]
    biases[2, :NHID1] = np.asarray(params["fb1"])
    biases[3, :NHID2] = np.asarray(params["fb2"])
    biases[4, :NOUT] = np.asarray(params["fb3"])

    # fc1 weights permuted to row = j*96 + co*8 + b*4 + v (matches f4 layout),
    # reproducing torch.flatten((B, C, H, W)) order.
    fw1 = np.asarray(params["fw1"])                            # (100, 384)
    fw1k = (fw1.reshape(NHID1, BATCH, C2, P2, P2)              # (o, b, c, j, v)
               .transpose(3, 2, 1, 4, 0)                       # (j, c, b, v, o)
               .reshape(FC_IN, NHID1))                         # (384, 100)

    return {
        "band1": jnp.asarray(band1), "band2": jnp.asarray(band2),
        "rsel1": jnp.asarray(rsel1), "csel1": jnp.asarray(csel1),
        "rsel2": jnp.asarray(rsel2), "csel2": jnp.asarray(csel2),
        "biases": jnp.asarray(biases),
        "fw1k": jnp.asarray(fw1k),
        "fw2k": jnp.asarray(np.asarray(params["fw2"]).T),      # (100, 50)
        "fw3k": jnp.asarray(np.asarray(params["fw3"]).T),      # (50, 2)
    }


# -------------------------------- wrapper ---------------------------------------
@jax.jit
def model_forward(x_nchw, prep):
    # tiny layout glue: (B,1,H,W) -> (H, B*W), col = b*28 + w (batch in lane blocks)
    xk = jnp.transpose(x_nchw[:, 0], (1, 0, 2)).reshape(IMG_SIZE, XW1)

    vmem = pl.BlockSpec(memory_space=pltpu.MemorySpace.VMEM)
    out = pl.pallas_call(
        fused_kernel,
        out_shape=jax.ShapeDtypeStruct((1, NOUT), jnp.float32),
        in_specs=[vmem] * 11,
        out_specs=vmem,
        scratch_shapes=[pltpu.VMEM((P1, S1C), jnp.float32)],   # pooled1 activations
        compiler_params=pltpu.CompilerParams(vmem_limit_bytes=16 * 1024 * 1024),
    )(xk, prep["band1"], prep["band2"], prep["rsel1"], prep["csel1"],
      prep["rsel2"], prep["csel2"], prep["biases"],
      prep["fw1k"], prep["fw2k"], prep["fw3k"])
    return out.reshape(-1)                                     # (2,), matches torch


# ------------------------------- reference --------------------------------------
def ref_forward(x_nchw, params):
    dn = ("NCHW", "OIHW", "NCHW")
    y = lax.conv_general_dilated(x_nchw, params["w1"], (1, 1), "VALID",
                                 dimension_numbers=dn)
    y = jnp.maximum(y + params["b1"][None, :, None, None], 0.0)
    B, C, H, W = y.shape
    y = y.reshape(B, C, H // 2, 2, W // 2, 2).max(axis=(3, 5))
    y = lax.conv_general_dilated(y, params["w2"], (1, 1), "VALID",
                                 dimension_numbers=dn)
    y = jnp.maximum(y + params["b2"][None, :, None, None], 0.0)
    B, C, H, W = y.shape
    y = y.reshape(B, C, H // 2, 2, W // 2, 2).max(axis=(3, 5))
    v = y.reshape(-1)                                          # torch.flatten of NCHW
    h = jnp.maximum(params["fw1"] @ v + params["fb1"], 0.0)
    h = jnp.maximum(params["fw2"] @ h + params["fb2"], 0.0)
    return params["fw3"] @ h + params["fb3"]


if __name__ == "__main__":
    key = jax.random.PRNGKey(0)
    pkey, xkey = jax.random.split(key)
    params, conv2_size = init_params(pkey, IMG_SIZE, BATCH)
    assert conv2_size == P2
    x = jax.random.normal(xkey, (BATCH, 1, IMG_SIZE, IMG_SIZE), jnp.float32)

    prep = prepare_params(params)                              # one-time weight prep
    out = jax.block_until_ready(model_forward(x, prep))
    ref = jax.block_until_ready(ref_forward(x, params))

    assert out.shape == (2,), out.shape
    assert jnp.allclose(out, ref, atol=2e-3, rtol=2e-3), (out, ref)
    print("KERNEL_OK")
</pallas_src>

<mosaic_0001>
module attributes {stable_mosaic.version = 11 : i64} {
  func.func @fused_kernel(%arg0: memref<28x56xf32, #tpu.memory_space<vmem>>, %arg1: memref<5x56x288xf32, #tpu.memory_space<vmem>>, %arg2: memref<5x144x192xf32, #tpu.memory_space<vmem>>, %arg3: memref<2x12x24xf32, #tpu.memory_space<vmem>>, %arg4: memref<2x288x144xf32, #tpu.memory_space<vmem>>, %arg5: memref<2x4x8xf32, #tpu.memory_space<vmem>>, %arg6: memref<2x192x96xf32, #tpu.memory_space<vmem>>, %arg7: memref<5x144xf32, #tpu.memory_space<vmem>>, %arg8: memref<384x100xf32, #tpu.memory_space<vmem>>, %arg9: memref<100x50xf32, #tpu.memory_space<vmem>>, %arg10: memref<50x2xf32, #tpu.memory_space<vmem>>, %arg11: memref<1x2xf32, #tpu.memory_space<vmem>>, %arg12: memref<12x144xf32, #tpu.memory_space<vmem>>) attributes {dimension_semantics = [], scalar_prefetch = 0 : i64, scratch_operands = 1 : i64, tpu.core_type = #tpu.core_type<tc>} {
    %c0 = arith.constant 0 : index
    %c0_0 = arith.constant 0 : index
    %0 = vector.load %arg0[%c0, %c0_0] : memref<28x56xf32, #tpu.memory_space<vmem>>, vector<24x56xf32>
    %c0_1 = arith.constant 0 : index
    %c0_2 = arith.constant 0 : index
    %c0_3 = arith.constant 0 : index
    %1 = vector.load %arg1[%c0_1, %c0_2, %c0_3] : memref<5x56x288xf32, #tpu.memory_space<vmem>>, vector<1x56x288xf32>
    %2 = vector.shape_cast %1 : vector<1x56x288xf32> to vector<56x288xf32>
    %cst = arith.constant dense<0.000000e+00> : vector<24x288xf32>
    %3 = tpu.matmul %0, %2, %cst {dimension_numbers = #tpu.dot_dimension_numbers<[1], [0], [0], [1], [0, 0, 1, 1], [], []>} : vector<24x56xf32>, vector<56x288xf32>, vector<24x288xf32> -> vector<24x288xf32>
    %c1 = arith.constant 1 : index
    %c0_4 = arith.constant 0 : index
    %4 = vector.load %arg0[%c1, %c0_4] : memref<28x56xf32, #tpu.memory_space<vmem>>, vector<24x56xf32>
    %c1_5 = arith.constant 1 : index
    %c0_6 = arith.constant 0 : index
    %c0_7 = arith.constant 0 : index
    %5 = vector.load %arg1[%c1_5, %c0_6, %c0_7] : memref<5x56x288xf32, #tpu.memory_space<vmem>>, vector<1x56x288xf32>
    %6 = vector.shape_cast %5 : vector<1x56x288xf32> to vector<56x288xf32>
    %cst_8 = arith.constant dense<0.000000e+00> : vector<24x288xf32>
    %7 = tpu.matmul %4, %6, %cst_8 {dimension_numbers = #tpu.dot_dimension_numbers<[1], [0], [0], [1], [0, 0, 1, 1], [], []>} : vector<24x56xf32>, vector<56x288xf32>, vector<24x288xf32> -> vector<24x288xf32>
    %c2 = arith.constant 2 : index
    %c0_9 = arith.constant 0 : index
    %8 = vector.load %arg0[%c2, %c0_9] : memref<28x56xf32, #tpu.memory_space<vmem>>, vector<24x56xf32>
    %c2_10 = arith.constant 2 : index
    %c0_11 = arith.constant 0 : index
    %c0_12 = arith.constant 0 : index
    %9 = vector.load %arg1[%c2_10, %c0_11, %c0_12] : memref<5x56x288xf32, #tpu.memory_space<vmem>>, vector<1x56x288xf32>
    %10 = vector.shape_cast %9 : vector<1x56x288xf32> to vector<56x288xf32>
    %cst_13 = arith.constant dense<0.000000e+00> : vector<24x288xf32>
    %11 = tpu.matmul %8, %10, %cst_13 {dimension_numbers = #tpu.dot_dimension_numbers<[1], [0], [0], [1], [0, 0, 1, 1], [], []>} : vector<24x56xf32>, vector<56x288xf32>, vector<24x288xf32> -> vector<24x288xf32>
    %c3 = arith.constant 3 : index
    %c0_14 = arith.constant 0 : index
    %12 = vector.load %arg0[%c3, %c0_14] : memref<28x56xf32, #tpu.memory_space<vmem>>, vector<24x56xf32>
    %c3_15 = arith.constant 3 : index
    %c0_16 = arith.constant 0 : index
    %c0_17 = arith.constant 0 : index
    %13 = vector.load %arg1[%c3_15, %c0_16, %c0_17] : memref<5x56x288xf32, #tpu.memory_space<vmem>>, vector<1x56x288xf32>
    %14 = vector.shape_cast %13 : vector<1x56x288xf32> to vector<56x288xf32>
    %cst_18 = arith.constant dense<0.000000e+00> : vector<24x288xf32>
    %15 = tpu.matmul %12, %14, %cst_18 {dimension_numbers = #tpu.dot_dimension_numbers<[1], [0], [0], [1], [0, 0, 1, 1], [], []>} : vector<24x56xf32>, vector<56x288xf32>, vector<24x288xf32> -> vector<24x288xf32>
    %c4 = arith.constant 4 : index
    %c0_19 = arith.constant 0 : index
    %16 = vector.load %arg0[%c4, %c0_19] : memref<28x56xf32, #tpu.memory_space<vmem>>, vector<24x56xf32>
    %c4_20 = arith.constant 4 : index
    %c0_21 = arith.constant 0 : index
    %c0_22 = arith.constant 0 : index
    %17 = vector.load %arg1[%c4_20, %c0_21, %c0_22] : memref<5x56x288xf32, #tpu.memory_space<vmem>>, vector<1x56x288xf32>
    %18 = vector.shape_cast %17 : vector<1x56x288xf32> to vector<56x288xf32>
    %cst_23 = arith.constant dense<0.000000e+00> : vector<24x288xf32>
    %19 = tpu.matmul %16, %18, %cst_23 {dimension_numbers = #tpu.dot_dimension_numbers<[1], [0], [0], [1], [0, 0, 1, 1], [], []>} : vector<24x56xf32>, vector<56x288xf32>, vector<24x288xf32> -> vector<24x288xf32>
    %20 = arith.addf %3, %7 : vector<24x288xf32>
    %21 = arith.addf %11, %15 : vector<24x288xf32>
    %22 = arith.addf %20, %21 : vector<24x288xf32>
    %23 = arith.addf %22, %19 : vector<24x288xf32>
    %c0_24 = arith.constant 0 : index
    %c0_25 = arith.constant 0 : index
    %c0_26 = arith.constant 0 : index
    %24 = vector.load %arg3[%c0_24, %c0_25, %c0_26] : memref<2x12x24xf32, #tpu.memory_space<vmem>>, vector<1x12x24xf32>
    %25 = vector.shape_cast %24 : vector<1x12x24xf32> to vector<12x24xf32>
    %cst_27 = arith.constant dense<0.000000e+00> : vector<12x288xf32>
    %26 = tpu.matmul %25, %23, %cst_27 {dimension_numbers = #tpu.dot_dimension_numbers<[1], [0], [0], [1], [0, 0, 1, 1], [], []>} : vector<12x24xf32>, vector<24x288xf32>, vector<12x288xf32> -> vector<12x288xf32>
    %c1_28 = arith.constant 1 : index
    %c0_29 = arith.constant 0 : index
    %c0_30 = arith.constant 0 : index
    %27 = vector.load %arg3[%c1_28, %c0_29, %c0_30] : memref<2x12x24xf32, #tpu.memory_space<vmem>>, vector<1x12x24xf32>
    %28 = vector.shape_cast %27 : vector<1x12x24xf32> to vector<12x24xf32>
    %cst_31 = arith.constant dense<0.000000e+00> : vector<12x288xf32>
    %29 = tpu.matmul %28, %23, %cst_31 {dimension_numbers = #tpu.dot_dimension_numbers<[1], [0], [0], [1], [0, 0, 1, 1], [], []>} : vector<12x24xf32>, vector<24x288xf32>, vector<12x288xf32> -> vector<12x288xf32>
    %30 = arith.maximumf %26, %29 : vector<12x288xf32>
    %c0_32 = arith.constant 0 : index
    %c0_33 = arith.constant 0 : index
    %c0_34 = arith.constant 0 : index
    %31 = vector.load %arg4[%c0_32, %c0_33, %c0_34] : memref<2x288x144xf32, #tpu.memory_space<vmem>>, vector<1x288x144xf32>
    %32 = vector.shape_cast %31 : vector<1x288x144xf32> to vector<288x144xf32>
    %cst_35 = arith.constant dense<0.000000e+00> : vector<12x144xf32>
    %33 = tpu.matmul %30, %32, %cst_35 {dimension_numbers = #tpu.dot_dimension_numbers<[1], [0], [0], [1], [0, 0, 1, 1], [], []>} : vector<12x288xf32>, vector<288x144xf32>, vector<12x144xf32> -> vector<12x144xf32>
    %c1_36 = arith.constant 1 : index
    %c0_37 = arith.constant 0 : index
    %c0_38 = arith.constant 0 : index
    %34 = vector.load %arg4[%c1_36, %c0_37, %c0_38] : memref<2x288x144xf32, #tpu.memory_space<vmem>>, vector<1x288x144xf32>
    %35 = vector.shape_cast %34 : vector<1x288x144xf32> to vector<288x144xf32>
    %cst_39 = arith.constant dense<0.000000e+00> : vector<12x144xf32>
    %36 = tpu.matmul %30, %35, %cst_39 {dimension_numbers = #tpu.dot_dimension_numbers<[1], [0], [0], [1], [0, 0, 1, 1], [], []>} : vector<12x288xf32>, vector<288x144xf32>, vector<12x144xf32> -> vector<12x144xf32>
    %37 = arith.maximumf %33, %36 : vector<12x144xf32>
    %c0_40 = arith.constant 0 : index
    %c0_41 = arith.constant 0 : index
    %38 = vector.load %arg7[%c0_40, %c0_41] : memref<5x144xf32, #tpu.memory_space<vmem>>, vector<1x144xf32>
    %39 = vector.broadcast %38 : vector<1x144xf32> to vector<12x144xf32>
    %40 = arith.addf %37, %39 : vector<12x144xf32>
    %cst_42 = arith.constant 0.000000e+00 : f32
    %41 = vector.broadcast %cst_42 : f32 to vector<12x144xf32>
    %42 = arith.maximumf %40, %41 : vector<12x144xf32>
    %c0_43 = arith.constant 0 : index
    %c0_44 = arith.constant 0 : index
    %43 = vector.load %arg12[%c0_43, %c0_44] : memref<12x144xf32, #tpu.memory_space<vmem>>, vector<12x144xf32>
    tpu.vector_store %arg12[%c0_43, %c0_44], %42 {strides = array<i32>} : memref<12x144xf32, #tpu.memory_space<vmem>>, vector<12x144xf32>,
    %c0_45 = arith.constant 0 : index
    %c0_46 = arith.constant 0 : index
    %44 = vector.load %arg12[%c0_45, %c0_46] : memref<12x144xf32, #tpu.memory_space<vmem>>, vector<8x144xf32>
    %c0_47 = arith.constant 0 : index
    %c0_48 = arith.constant 0 : index
    %c0_49 = arith.constant 0 : index
    %45 = vector.load %arg2[%c0_47, %c0_48, %c0_49] : memref<5x144x192xf32, #tpu.memory_space<vmem>>, vector<1x144x192xf32>
    %46 = vector.shape_cast %45 : vector<1x144x192xf32> to vector<144x192xf32>
    %cst_50 = arith.constant dense<0.000000e+00> : vector<8x192xf32>
    %47 = tpu.matmul %44, %46, %cst_50 {dimension_numbers = #tpu.dot_dimension_numbers<[1], [0], [0], [1], [0, 0, 1, 1], [], []>} : vector<8x144xf32>, vector<144x192xf32>, vector<8x192xf32> -> vector<8x192xf32>
    %c1_51 = arith.constant 1 : index
    %c0_52 = arith.constant 0 : index
    %48 = vector.load %arg12[%c1_51, %c0_52] : memref<12x144xf32, #tpu.memory_space<vmem>>, vector<8x144xf32>
    %c1_53 = arith.constant 1 : index
    %c0_54 = arith.constant 0 : index
    %c0_55 = arith.constant 0 : index
    %49 = vector.load %arg2[%c1_53, %c0_54, %c0_55] : memref<5x144x192xf32, #tpu.memory_space<vmem>>, vector<1x144x192xf32>
    %50 = vector.shape_cast %49 : vector<1x144x192xf32> to vector<144x192xf32>
    %cst_56 = arith.constant dense<0.000000e+00> : vector<8x192xf32>
    %51 = tpu.matmul %48, %50, %cst_56 {dimension_numbers = #tpu.dot_dimension_numbers<[1], [0], [0], [1], [0, 0, 1, 1], [], []>} : vector<8x144xf32>, vector<144x192xf32>, vector<8x192xf32> -> vector<8x192xf32>
    %c2_57 = arith.constant 2 : index
    %c0_58 = arith.constant 0 : index
    %52 = vector.load %arg12[%c2_57, %c0_58] : memref<12x144xf32, #tpu.memory_space<vmem>>, vector<8x144xf32>
    %c2_59 = arith.constant 2 : index
    %c0_60 = arith.constant 0 : index
    %c0_61 = arith.constant 0 : index
    %53 = vector.load %arg2[%c2_59, %c0_60, %c0_61] : memref<5x144x192xf32, #tpu.memory_space<vmem>>, vector<1x144x192xf32>
    %54 = vector.shape_cast %53 : vector<1x144x192xf32> to vector<144x192xf32>
    %cst_62 = arith.constant dense<0.000000e+00> : vector<8x192xf32>
    %55 = tpu.matmul %52, %54, %cst_62 {dimension_numbers = #tpu.dot_dimension_numbers<[1], [0], [0], [1], [0, 0, 1, 1], [], []>} : vector<8x144xf32>, vector<144x192xf32>, vector<8x192xf32> -> vector<8x192xf32>
    %c3_63 = arith.constant 3 : index
    %c0_64 = arith.constant 0 : index
    %56 = vector.load %arg12[%c3_63, %c0_64] : memref<12x144xf32, #tpu.memory_space<vmem>>, vector<8x144xf32>
    %c3_65 = arith.constant 3 : index
    %c0_66 = arith.constant 0 : index
    %c0_67 = arith.constant 0 : index
    %57 = vector.load %arg2[%c3_65, %c0_66, %c0_67] : memref<5x144x192xf32, #tpu.memory_space<vmem>>, vector<1x144x192xf32>
    %58 = vector.shape_cast %57 : vector<1x144x192xf32> to vector<144x192xf32>
    %cst_68 = arith.constant dense<0.000000e+00> : vector<8x192xf32>
    %59 = tpu.matmul %56, %58, %cst_68 {dimension_numbers = #tpu.dot_dimension_numbers<[1], [0], [0], [1], [0, 0, 1, 1], [], []>} : vector<8x144xf32>, vector<144x192xf32>, vector<8x192xf32> -> vector<8x192xf32>
    %c4_69 = arith.constant 4 : index
    %c0_70 = arith.constant 0 : index
    %60 = vector.load %arg12[%c4_69, %c0_70] : memref<12x144xf32, #tpu.memory_space<vmem>>, vector<8x144xf32>
    %c4_71 = arith.constant 4 : index
    %c0_72 = arith.constant 0 : index
    %c0_73 = arith.constant 0 : index
    %61 = vector.load %arg2[%c4_71, %c0_72, %c0_73] : memref<5x144x192xf32, #tpu.memory_space<vmem>>, vector<1x144x192xf32>
    %62 = vector.shape_cast %61 : vector<1x144x192xf32> to vector<144x192xf32>
    %cst_74 = arith.constant dense<0.000000e+00> : vector<8x192xf32>
    %63 = tpu.matmul %60, %62, %cst_74 {dimension_numbers = #tpu.dot_dimension_numbers<[1], [0], [0], [1], [0, 0, 1, 1], [], []>} : vector<8x144xf32>, vector<144x192xf32>, vector<8x192xf32> -> vector<8x192xf32>
    %64 = arith.addf %47, %51 : vector<8x192xf32>
    %65 = arith.addf %55, %59 : vector<8x192xf32>
    %66 = arith.addf %64, %65 : vector<8x192xf32>
    %67 = arith.addf %66, %63 : vector<8x192xf32>
    %c0_75 = arith.constant 0 : index
    %c0_76 = arith.constant 0 : index
    %c0_77 = arith.constant 0 : index
    %68 = vector.load %arg5[%c0_75, %c0_76, %c0_77] : memref<2x4x8xf32, #tpu.memory_space<vmem>>, vector<1x4x8xf32>
    %69 = vector.shape_cast %68 : vector<1x4x8xf32> to vector<4x8xf32>
    %cst_78 = arith.constant dense<0.000000e+00> : vector<4x192xf32>
    %70 = tpu.matmul %69, %67, %cst_78 {dimension_numbers = #tpu.dot_dimension_numbers<[1], [0], [0], [1], [0, 0, 1, 1], [], []>} : vector<4x8xf32>, vector<8x192xf32>, vector<4x192xf32> -> vector<4x192xf32>
    %c1_79 = arith.constant 1 : index
    %c0_80 = arith.constant 0 : index
    %c0_81 = arith.constant 0 : index
    %71 = vector.load %arg5[%c1_79, %c0_80, %c0_81] : memref<2x4x8xf32, #tpu.memory_space<vmem>>, vector<1x4x8xf32>
    %72 = vector.shape_cast %71 : vector<1x4x8xf32> to vector<4x8xf32>
    %cst_82 = arith.constant dense<0.000000e+00> : vector<4x192xf32>
    %73 = tpu.matmul %72, %67, %cst_82 {dimension_numbers = #tpu.dot_dimension_numbers<[1], [0], [0], [1], [0, 0, 1, 1], [], []>} : vector<4x8xf32>, vector<8x192xf32>, vector<4x192xf32> -> vector<4x192xf32>
    %74 = arith.maximumf %70, %73 : vector<4x192xf32>
    %c0_83 = arith.constant 0 : index
    %c0_84 = arith.constant 0 : index
    %c0_85 = arith.constant 0 : index
    %75 = vector.load %arg6[%c0_83, %c0_84, %c0_85] : memref<2x192x96xf32, #tpu.memory_space<vmem>>, vector<1x192x96xf32>
    %76 = vector.shape_cast %75 : vector<1x192x96xf32> to vector<192x96xf32>
    %cst_86 = arith.constant dense<0.000000e+00> : vector<4x96xf32>
    %77 = tpu.matmul %74, %76, %cst_86 {dimension_numbers = #tpu.dot_dimension_numbers<[1], [0], [0], [1], [0, 0, 1, 1], [], []>} : vector<4x192xf32>, vector<192x96xf32>, vector<4x96xf32> -> vector<4x96xf32>
    %c1_87 = arith.constant 1 : index
    %c0_88 = arith.constant 0 : index
    %c0_89 = arith.constant 0 : index
    %78 = vector.load %arg6[%c1_87, %c0_88, %c0_89] : memref<2x192x96xf32, #tpu.memory_space<vmem>>, vector<1x192x96xf32>
    %79 = vector.shape_cast %78 : vector<1x192x96xf32> to vector<192x96xf32>
    %cst_90 = arith.constant dense<0.000000e+00> : vector<4x96xf32>
    %80 = tpu.matmul %74, %79, %cst_90 {dimension_numbers = #tpu.dot_dimension_numbers<[1], [0], [0], [1], [0, 0, 1, 1], [], []>} : vector<4x192xf32>, vector<192x96xf32>, vector<4x96xf32> -> vector<4x96xf32>
    %81 = arith.maximumf %77, %80 : vector<4x96xf32>
    %c1_91 = arith.constant 1 : index
    %c0_92 = arith.constant 0 : index
    %82 = vector.load %arg7[%c1_91, %c0_92] : memref<5x144xf32, #tpu.memory_space<vmem>>, vector<1x96xf32>
    %83 = vector.broadcast %82 : vector<1x96xf32> to vector<4x96xf32>
    %84 = arith.addf %81, %83 : vector<4x96xf32>
    %cst_93 = arith.constant 0.000000e+00 : f32
    %85 = vector.broadcast %cst_93 : f32 to vector<4x96xf32>
    %86 = arith.maximumf %84, %85 : vector<4x96xf32>
    %87 = vector.extract_strided_slice %86 {offsets = [0, 0], sizes = [1, 96], strides = [1, 1]} : vector<4x96xf32> to vector<1x96xf32>
    %c0_94 = arith.constant 0 : index
    %c0_95 = arith.constant 0 : index
    %88 = vector.load %arg8[%c0_94, %c0_95] : memref<384x100xf32, #tpu.memory_space<vmem>>, vector<96x100xf32>
    %cst_96 = arith.constant dense<0.000000e+00> : vector<1x100xf32>
    %89 = tpu.matmul %87, %88, %cst_96 {dimension_numbers = #tpu.dot_dimension_numbers<[1], [0], [0], [1], [0, 0, 1, 1], [], []>} : vector<1x96xf32>, vector<96x100xf32>, vector<1x100xf32> -> vector<1x100xf32>
    %90 = vector.extract_strided_slice %86 {offsets = [1, 0], sizes = [1, 96], strides = [1, 1]} : vector<4x96xf32> to vector<1x96xf32>
    %c96 = arith.constant 96 : index
    %c0_97 = arith.constant 0 : index
    %91 = vector.load %arg8[%c96, %c0_97] : memref<384x100xf32, #tpu.memory_space<vmem>>, vector<96x100xf32>
    %cst_98 = arith.constant dense<0.000000e+00> : vector<1x100xf32>
    %92 = tpu.matmul %90, %91, %cst_98 {dimension_numbers = #tpu.dot_dimension_numbers<[1], [0], [0], [1], [0, 0, 1, 1], [], []>} : vector<1x96xf32>, vector<96x100xf32>, vector<1x100xf32> -> vector<1x100xf32>
    %93 = vector.extract_strided_slice %86 {offsets = [2, 0], sizes = [1, 96], strides = [1, 1]} : vector<4x96xf32> to vector<1x96xf32>
    %c192 = arith.constant 192 : index
    %c0_99 = arith.constant 0 : index
    %94 = vector.load %arg8[%c192, %c0_99] : memref<384x100xf32, #tpu.memory_space<vmem>>, vector<96x100xf32>
    %cst_100 = arith.constant dense<0.000000e+00> : vector<1x100xf32>
    %95 = tpu.matmul %93, %94, %cst_100 {dimension_numbers = #tpu.dot_dimension_numbers<[1], [0], [0], [1], [0, 0, 1, 1], [], []>} : vector<1x96xf32>, vector<96x100xf32>, vector<1x100xf32> -> vector<1x100xf32>
    %96 = vector.extract_strided_slice %86 {offsets = [3, 0], sizes = [1, 96], strides = [1, 1]} : vector<4x96xf32> to vector<1x96xf32>
    %c288 = arith.constant 288 : index
    %c0_101 = arith.constant 0 : index
    %97 = vector.load %arg8[%c288, %c0_101] : memref<384x100xf32, #tpu.memory_space<vmem>>, vector<96x100xf32>
    %cst_102 = arith.constant dense<0.000000e+00> : vector<1x100xf32>
    %98 = tpu.matmul %96, %97, %cst_102 {dimension_numbers = #tpu.dot_dimension_numbers<[1], [0], [0], [1], [0, 0, 1, 1], [], []>} : vector<1x96xf32>, vector<96x100xf32>, vector<1x100xf32> -> vector<1x100xf32>
    %99 = arith.addf %89, %92 : vector<1x100xf32>
    %100 = arith.addf %95, %98 : vector<1x100xf32>
    %101 = arith.addf %99, %100 : vector<1x100xf32>
    %c2_103 = arith.constant 2 : index
    %c0_104 = arith.constant 0 : index
    %102 = vector.load %arg7[%c2_103, %c0_104] : memref<5x144xf32, #tpu.memory_space<vmem>>, vector<1x100xf32>
    %103 = arith.addf %101, %102 : vector<1x100xf32>
    %cst_105 = arith.constant 0.000000e+00 : f32
    %104 = vector.broadcast %cst_105 : f32 to vector<1x100xf32>
    %105 = arith.maximumf %103, %104 : vector<1x100xf32>
    %c0_106 = arith.constant 0 : index
    %c0_107 = arith.constant 0 : index
    %106 = vector.load %arg9[%c0_106, %c0_107] : memref<100x50xf32, #tpu.memory_space<vmem>>, vector<100x50xf32>
    %cst_108 = arith.constant dense<0.000000e+00> : vector<1x50xf32>
    %107 = tpu.matmul %105, %106, %cst_108 {dimension_numbers = #tpu.dot_dimension_numbers<[1], [0], [0], [1], [0, 0, 1, 1], [], []>} : vector<1x100xf32>, vector<100x50xf32>, vector<1x50xf32> -> vector<1x50xf32>
    %c3_109 = arith.constant 3 : index
    %c0_110 = arith.constant 0 : index
    %108 = vector.load %arg7[%c3_109, %c0_110] : memref<5x144xf32, #tpu.memory_space<vmem>>, vector<1x50xf32>
    %109 = arith.addf %107, %108 : vector<1x50xf32>
    %cst_111 = arith.constant 0.000000e+00 : f32
    %110 = vector.broadcast %cst_111 : f32 to vector<1x50xf32>
    %111 = arith.maximumf %109, %110 : vector<1x50xf32>
    %c0_112 = arith.constant 0 : index
    %c0_113 = arith.constant 0 : index
    %112 = vector.load %arg10[%c0_112, %c0_113] : memref<50x2xf32, #tpu.memory_space<vmem>>, vector<50x2xf32>
    %cst_114 = arith.constant dense<0.000000e+00> : vector<1x2xf32>
    %113 = tpu.matmul %111, %112, %cst_114 {dimension_numbers = #tpu.dot_dimension_numbers<[1], [0], [0], [1], [0, 0, 1, 1], [], []>} : vector<1x50xf32>, vector<50x2xf32>, vector<1x2xf32> -> vector<1x2xf32>
    %c4_115 = arith.constant 4 : index
    %c0_116 = arith.constant 0 : index
    %114 = vector.load %arg7[%c4_115, %c0_116] : memref<5x144xf32, #tpu.memory_space<vmem>>, vector<1x2xf32>
    %115 = arith.addf %113, %114 : vector<1x2xf32>
    %c0_117 = arith.constant 0 : index
    %c0_118 = arith.constant 0 : index
    %116 = vector.load %arg11[%c0_117, %c0_118] : memref<1x2xf32, #tpu.memory_space<vmem>>, vector<1x2xf32>
    tpu.vector_store %arg11[%c0_117, %c0_118], %115 {strides = array<i32>} : memref<1x2xf32, #tpu.memory_space<vmem>>, vector<1x2xf32>,
    return
  }
}

</mosaic_0001>

<llo_original>
// kernel: model_forward.1
$region0: #{model_forward.1}
  #allocation0 [shape = 'u32[]', space=smem, size = 0x4, offset = 0x4, fixed_abs, tag = 'smem constant byte address 0x4 - core index']
  #allocation1 [shape = 'u32[72,128]{1,0:T(1,128)}', space=vmem, size = 0x9000, scoped, tag = 'internal scratch']
  #allocation2 [shape = 'f32[12,144]{1,0:T(8,128)}', space=vmem, size = 0x4000, scoped, tag = 'scratch operand']
  %s0 = inlined_call_operand.vmem [shape: f32[28,56], index: 0, kind: input, shape index: {}]
  %s1 = inlined_call_operand.vmem [shape: f32[5,56,288], index: 1, kind: input, shape index: {}]
  %s2 = inlined_call_operand.vmem [shape: f32[5,144,192], index: 2, kind: input, shape index: {}]
  %s3 = inlined_call_operand.vmem [shape: f32[2,12,24], index: 3, kind: input, shape index: {}]
  %s4 = inlined_call_operand.vmem [shape: f32[2,288,144], index: 4, kind: input, shape index: {}]
  %s5 = inlined_call_operand.vmem [shape: f32[2,4,8], index: 5, kind: input, shape index: {}]
  %s6 = inlined_call_operand.hbm [shape: f32[2,192,96], index: 6, kind: input, shape index: {}]
  %s7 = inlined_call_operand.vmem [shape: f32[5,144], index: 7, kind: input, shape index: {}]
  %s8 = inlined_call_operand.vmem [shape: f32[384,100], index: 8, kind: input, shape index: {}]
  %s9 = inlined_call_operand.vmem [shape: f32[100,50], index: 9, kind: input, shape index: {}]
  %s10 = inlined_call_operand.vmem [shape: f32[50,2], index: 10, kind: input, shape index: {}]
  %s11 = inlined_call_operand.hbm [shape: f32[1,2], index: 11, kind: output, shape index: {}]
  %s12 = sld [smem:[#allocation0]]
  $region58: #{model_forward.1} parent=0
    _
  %s14 = ssub.s32 1, %s12
  %s15 = scalar_select 0, %s14, %s12
  $region1: #{model_forward.1} parent=0
    #allocation3 [shape = 'u8[196608]{0}', space=vmem, size = 0x30000, scoped, tag = 'input window, operand 6, single buffered']
    #allocation4 [shape = 's32[1]{0}', space=sflag, size = 0x4, scoped, tag = 'scoped memory for model_forward.1']
    #allocation5 [shape = 's32[1]{0}', space=sflag, size = 0x4, scoped, tag = 'scoped memory for model_forward.1']
    #allocation6 [shape = 'u8[512]{0}', space=vmem, size = 0x400, scoped, tag = 'output window, operand 0, single buffered']
    %16 = vsyncpa [#allocation4], 0
    %17 = vsyncpa [#allocation5], 0
    // Predicated region
    $region2: #{model_forward.1} parent=1 // pred_check
      _
    $region3: #{model_forward.1} parent=1 // pred_check_branch
      %19 = sbr.rel (0) target = $region5
    $region4: #{model_forward.1} parent=1 // pred_region
      _
    $region5: #{model_forward.1} parent=1 // pred_fallthru
      _
    // Predicated region
    $region6: #{model_forward.1} parent=1 // pred_check
      _
    $region7: #{model_forward.1} parent=1 // pred_check_branch
      %21 = sbr.rel (0) target = $region9
    $region8: #{model_forward.1} parent=1 // pred_region
      _
    $region9: #{model_forward.1} parent=1 // pred_fallthru
      _
    // Predicated region
    $region10: #{model_forward.1} parent=1 // pred_check
      _
    $region11: #{model_forward.1} parent=1 // pred_check_branch
      %23 = sbr.rel (0) target = $region13
    $region12: #{model_forward.1} parent=1 // pred_region
      _
    $region13: #{model_forward.1} parent=1 // pred_fallthru
      _
    // Predicated region
    $region14: #{model_forward.1} parent=1 // pred_check
      _
    $region15: #{model_forward.1} parent=1 // pred_check_branch
      %25 = sbr.rel (0) target = $region17
    $region16: #{model_forward.1} parent=1 // pred_region
      _
    $region17: #{model_forward.1} parent=1 // pred_fallthru
      _
    // Predicated region
    $region18: #{model_forward.1} parent=1 // pred_check
      _
    $region19: #{model_forward.1} parent=1 // pred_check_branch
      %27 = sbr.rel (0) target = $region21
    $region20: #{model_forward.1} parent=1 // pred_region
      _
    $region21: #{model_forward.1} parent=1 // pred_fallthru
      _
    // Predicated region
    $region22: #{model_forward.1} parent=1 // pred_check
      _
    $region23: #{model_forward.1} parent=1 // pred_check_branch
      %29 = sbr.rel (0) target = $region25
    $region24: #{model_forward.1} parent=1 // pred_region
      _
    $region25: #{model_forward.1} parent=1 // pred_fallthru
      _
    // Predicated region
    $region26: #{model_forward.1} parent=1 // pred_check
      _
    $region27: #{model_forward.1} parent=1 // pred_check_branch
      %31 = sbr.rel (0) target = $region29
    $region28: #{model_forward.1} parent=1 // pred_region
      %33 = vsyncadd [#allocation4], 0
      %s34 = sshll.u32 %s6, 4
      %s35 = int_to_ptr.hbm [resolvable:$true] %s34
      %s36 = sshll.u32 [#allocation3], 4
      %s37 = int_to_ptr.vmem [resolvable:$true] %s36
      %42 = dma.hbm_to_vmem [thread:$0]  %s35, 6144, %s37, [#allocation4], 128, 128, 8
    $region29: #{model_forward.1} parent=1 // pred_fallthru
      _
    // Predicated region
    $region30: #{model_forward.1} parent=1 // pred_check
      _
    $region31: #{model_forward.1} parent=1 // pred_check_branch
      %44 = sbr.rel (0) target = $region33
    $region32: #{model_forward.1} parent=1 // pred_region
      _
    $region33: #{model_forward.1} parent=1 // pred_fallthru
      _
    // Predicated region
    $region34: #{model_forward.1} parent=1 // pred_check
      _
    $region35: #{model_forward.1} parent=1 // pred_check_branch
      %46 = sbr.rel (0) target = $region37
    $region36: #{model_forward.1} parent=1 // pred_region
      _
    $region37: #{model_forward.1} parent=1 // pred_fallthru
      _
    // Predicated region
    $region38: #{model_forward.1} parent=1 // pred_check
      _
    $region39: #{model_forward.1} parent=1 // pred_check_branch
      %48 = sbr.rel (0) target = $region41
    $region40: #{model_forward.1} parent=1 // pred_region
      _
    $region41: #{model_forward.1} parent=1 // pred_fallthru
      _
    // Predicated region
    $region42: #{model_forward.1} parent=1 // pred_check
      _
    $region43: #{model_forward.1} parent=1 // pred_check_branch
      %50 = sbr.rel (0) target = $region45
    $region44: #{model_forward.1} parent=1 // pred_region
      _
    $region45: #{model_forward.1} parent=1 // pred_fallthru
      _
    // Predicated region
    $region46: #{model_forward.1} parent=1 // pred_check
      _
    $region47: #{model_forward.1} parent=1 // pred_check_branch
      %52 = sbr.rel (0) target = $region49
    $region48: #{model_forward.1} parent=1 // pred_region
      %54 = dma.done [#allocation4], 6144
    $region49: #{model_forward.1} parent=1 // pred_fallthru
      _
    %v55 = vld [vmem:[%s0] sm:$0xff]
    %v56 = vld [vmem:[%s0 + $0x8] sm:$0xff]
    %v57 = vld [vmem:[%s0 + $0x10] sm:$0xff]
    %v58 = vld [vmem:[%s1] sm:$0xff]
    %v59 = vld [vmem:[%s1 + $0x8] sm:$0xff]
    %v60 = vld [vmem:[%s1 + $0x10] sm:$0xff]
    %v61 = vld [vmem:[%s1 + $0x18] sm:$0xff]
    %v62 = vld [vmem:[%s1 + $0x20] sm:$0xff]
    %v63 = vld [vmem:[%s1 + $0x28] sm:$0xff]
    %v64 = vld [vmem:[%s1 + $0x30] sm:$0xff]
    %v65 = vld [vmem:[%s1 + $0x38] sm:$0xff]
    %v66 = vld [vmem:[%s1 + $0x40] sm:$0xff]
    %v67 = vld [vmem:[%s1 + $0x48] sm:$0xff]
    %v68 = vld [vmem:[%s1 + $0x50] sm:$0xff]
    %v69 = vld [vmem:[%s1 + $0x58] sm:$0xff]
    %v70 = vld [vmem:[%s1 + $0x60] sm:$0xff]
    %v71 = vld [vmem:[%s1 + $0x68] sm:$0xff]
    %v72 = vld [vmem:[%s1 + $0x70] sm:$0xff]
    %v73 = vld [vmem:[%s1 + $0x78] sm:$0xff]
    %v74 = vld [vmem:[%s1 + $0x80] sm:$0xff]
    %v75 = vld [vmem:[%s1 + $0x88] sm:$0xff]
    %v76 = vld [vmem:[%s1 + $0x90] sm:$0xff]
    %v77 = vld [vmem:[%s1 + $0x98] sm:$0xff]
    %v78 = vld [vmem:[%s1 + $0xa0] sm:$0xff]
    %v79 = vld [vmem:[%s0 + $0x1] sm:$0xff]
    %v80 = vld [vmem:[%s0 + $0x9] sm:$0xff]
    %v81 = vld [vmem:[%s0 + $0x11] sm:$0xff]
    %s82 = scalar_lea.vmem %s1, 168
    %v83 = vld [vmem:[%s82] sm:$0xff]
    %v84 = vld [vmem:[%s82 + $0x8] sm:$0xff]
    %v85 = vld [vmem:[%s82 + $0x10] sm:$0xff]
    %v86 = vld [vmem:[%s82 + $0x18] sm:$0xff]
    %v87 = vld [vmem:[%s82 + $0x20] sm:$0xff]
    %v88 = vld [vmem:[%s82 + $0x28] sm:$0xff]
    %v89 = vld [vmem:[%s82 + $0x30] sm:$0xff]
    %v90 = vld [vmem:[%s82 + $0x38] sm:$0xff]
    %v91 = vld [vmem:[%s82 + $0x40] sm:$0xff]
    %v92 = vld [vmem:[%s82 + $0x48] sm:$0xff]
    %v93 = vld [vmem:[%s82 + $0x50] sm:$0xff]
    %v94 = vld [vmem:[%s82 + $0x58] sm:$0xff]
    %v95 = vld [vmem:[%s82 + $0x60] sm:$0xff]
    %v96 = vld [vmem:[%s82 + $0x68] sm:$0xff]
    %v97 = vld [vmem:[%s82 + $0x70] sm:$0xff]
    %v98 = vld [vmem:[%s82 + $0x78] sm:$0xff]
    %v99 = vld [vmem:[%s82 + $0x80] sm:$0xff]
    %v100 = vld [vmem:[%s82 + $0x88] sm:$0xff]
    %v101 = vld [vmem:[%s82 + $0x90] sm:$0xff]
    %v102 = vld [vmem:[%s82 + $0x98] sm:$0xff]
    %v103 = vld [vmem:[%s82 + $0xa0] sm:$0xff]
    %vm104 = vcmask 457728
    %v106 = vsel %vm104, %v79, 0
    %v109 = vsel %vm104, %v80, 0
    %v112 = vsel %vm104, %v81, 0
    %114 = vmatpush.msra.mxu0 0.0
    %115 = vmatpush.msra.mxu0 0.0
    %116 = vmatpush.msra.mxu0 0.0
    %117 = vmatpush.msra.mxu0 0.0
    %118 = vmatpush.msra.mxu0 0.0
    %119 = vmatpush.msra.mxu0 0.0
    %120 = vmatpush.msra.mxu0 0.0
    %121 = vmatpush.msra.mxu0 0.0
    %122 = vmatpush.msra.mxu0 0.0
    %123 = vmatpush.msra.mxu0 %v101
    %124 = vmatpush.msra.mxu0 %v98
    %125 = vmatpush.msra.mxu0 %v95
    %126 = vmatpush.msra.mxu0 %v92
    %127 = vmatpush.msra.mxu0 %v89
    %128 = vmatpush.msra.mxu0 %v86
    %129 = vmatpush.msra.mxu0 %v83
    %130 = vmatmul.f32.gmra.mxu0 %v106
    %v131 = vpop.f32.mrf.mxu0
    %v132 = vadd.f32 0.0, %v131
    %133 = vmatmul.f32.gmra.mxu0 %v109
    %v134 = vpop.f32.mrf.mxu0
    %v135 = vadd.f32 0.0, %v134
    %136 = vmatmul.f32.gmra.mxu0 %v112
    %v137 = vpop.f32.mrf.mxu0
    %v138 = vadd.f32 0.0, %v137
    %139 = vdwg.mxu0
    %140 = vmatpush.msra.mxu0 0.0
    %141 = vmatpush.msra.mxu0 0.0
    %142 = vmatpush.msra.mxu0 0.0
    %143 = vmatpush.msra.mxu0 0.0
    %144 = vmatpush.msra.mxu0 0.0
    %145 = vmatpush.msra.mxu0 0.0
    %146 = vmatpush.msra.mxu0 0.0
    %147 = vmatpush.msra.mxu0 0.0
    %148 = vmatpush.msra.mxu0 0.0
    %149 = vmatpush.msra.mxu0 %v102
    %150 = vmatpush.msra.mxu0 %v99
    %151 = vmatpush.msra.mxu0 %v96
    %152 = vmatpush.msra.mxu0 %v93
    %153 = vmatpush.msra.mxu0 %v90
    %154 = vmatpush.msra.mxu0 %v87
    %155 = vmatpush.msra.mxu0 %v84
    %156 = vmatmul.f32.gmra.mxu0 %v106
    %v157 = vpop.f32.mrf.mxu0
    %v158 = vadd.f32 0.0, %v157
    %159 = vmatmul.f32.gmra.mxu0 %v109
    %v160 = vpop.f32.mrf.mxu0
    %v161 = vadd.f32 0.0, %v160
    %162 = vmatmul.f32.gmra.mxu0 %v112
    %v163 = vpop.f32.mrf.mxu0
    %v164 = vadd.f32 0.0, %v163
    %165 = vdwg.mxu0
    %166 = vmatpush.msra.mxu0 0.0
    %167 = vmatpush.msra.mxu0 0.0
    %168 = vmatpush.msra.mxu0 0.0
    %169 = vmatpush.msra.mxu0 0.0
    %170 = vmatpush.msra.mxu0 0.0
    %171 = vmatpush.msra.mxu0 0.0
    %172 = vmatpush.msra.mxu0 0.0
    %173 = vmatpush.msra.mxu0 0.0
    %174 = vmatpush.msra.mxu0 0.0
    %175 = vmatpush.msra.mxu0 %v103
    %176 = vmatpush.msra.mxu0 %v100
    %177 = vmatpush.msra.mxu0 %v97
    %178 = vmatpush.msra.mxu0 %v94
    %179 = vmatpush.msra.mxu0 %v91
    %180 = vmatpush.msra.mxu0 %v88
    %181 = vmatpush.msra.mxu0 %v85
    %182 = vmatmul.f32.gmra.mxu0 %v106
    %v183 = vpop.f32.mrf.mxu0
    %v184 = vadd.f32 0.0, %v183
    %185 = vmatmul.f32.gmra.mxu0 %v109
    %v186 = vpop.f32.mrf.mxu0
    %v187 = vadd.f32 0.0, %v186
    %188 = vmatmul.f32.gmra.mxu0 %v112
    %v189 = vpop.f32.mrf.mxu0
    %v190 = vadd.f32 0.0, %v189
    %191 = vdwg.mxu0
    %v192 = vld [vmem:[%s0 + $0x2] sm:$0xff]
    %v193 = vld [vmem:[%s0 + $0xa] sm:$0xff]
    %v194 = vld [vmem:[%s0 + $0x12] sm:$0xff]
    %s195 = scalar_lea.vmem %s1, 336
    %v196 = vld [vmem:[%s195] sm:$0xff]
    %v197 = vld [vmem:[%s195 + $0x8] sm:$0xff]
    %v198 = vld [vmem:[%s195 + $0x10] sm:$0xff]
    %v199 = vld [vmem:[%s195 + $0x18] sm:$0xff]
    %v200 = vld [vmem:[%s195 + $0x20] sm:$0xff]
    %v201 = vld [vmem:[%s195 + $0x28] sm:$0xff]
    %v202 = vld [vmem:[%s195 + $0x30] sm:$0xff]
    %v203 = vld [vmem:[%s195 + $0x38] sm:$0xff]
    %v204 = vld [vmem:[%s195 + $0x40] sm:$0xff]
    %v205 = vld [vmem:[%s195 + $0x48] sm:$0xff]
    %v206 = vld [vmem:[%s195 + $0x50] sm:$0xff]
    %v207 = vld [vmem:[%s195 + $0x58] sm:$0xff]
    %v208 = vld [vmem:[%s195 + $0x60] sm:$0xff]
    %v209 = vld [vmem:[%s195 + $0x68] sm:$0xff]
    %v210 = vld [vmem:[%s195 + $0x70] sm:$0xff]
    %v211 = vld [vmem:[%s195 + $0x78] sm:$0xff]
    %v212 = vld [vmem:[%s195 + $0x80] sm:$0xff]
    %v213 = vld [vmem:[%s195 + $0x88] sm:$0xff]
    %v214 = vld [vmem:[%s195 + $0x90] sm:$0xff]
    %v215 = vld [vmem:[%s195 + $0x98] sm:$0xff]
    %v216 = vld [vmem:[%s195 + $0xa0] sm:$0xff]
    %v217 = vld [vmem:[%s0 + $0x3] sm:$0xff]
    %v218 = vld [vmem:[%s0 + $0xb] sm:$0xff]
    %v219 = vld [vmem:[%s0 + $0x13] sm:$0xff]
    %s220 = scalar_lea.vmem %s1, 504
    %v221 = vld [vmem:[%s220] sm:$0xff]
    %v222 = vld [vmem:[%s220 + $0x8] sm:$0xff]
    %v223 = vld [vmem:[%s220 + $0x10] sm:$0xff]
    %v224 = vld [vmem:[%s220 + $0x18] sm:$0xff]
    %v225 = vld [vmem:[%s220 + $0x20] sm:$0xff]
    %v226 = vld [vmem:[%s220 + $0x28] sm:$0xff]
    %v227 = vld [vmem:[%s220 + $0x30] sm:$0xff]
    %v228 = vld [vmem:[%s220 + $0x38] sm:$0xff]
    %v229 = vld [vmem:[%s220 + $0x40] sm:$0xff]
    %v230 = vld [vmem:[%s220 + $0x48] sm:$0xff]
    %v231 = vld [vmem:[%s220 + $0x50] sm:$0xff]
    %v232 = vld [vmem:[%s220 + $0x58] sm:$0xff]
    %v233 = vld [vmem:[%s220 + $0x60] sm:$0xff]
    %v234 = vld [vmem:[%s220 + $0x68] sm:$0xff]
    %v235 = vld [vmem:[%s220 + $0x70] sm:$0xff]
    %v236 = vld [vmem:[%s220 + $0x78] sm:$0xff]
    %v237 = vld [vmem:[%s220 + $0x80] sm:$0xff]
    %v238 = vld [vmem:[%s220 + $0x88] sm:$0xff]
    %v239 = vld [vmem:[%s220 + $0x90] sm:$0xff]
    %v240 = vld [vmem:[%s220 + $0x98] sm:$0xff]
    %v241 = vld [vmem:[%s220 + $0xa0] sm:$0xff]
    %v243 = vsel %vm104, %v217, 0
    %v246 = vsel %vm104, %v218, 0
    %v249 = vsel %vm104, %v219, 0
    %251 = vmatpush.msra.mxu0 0.0
    %252 = vmatpush.msra.mxu0 0.0
    %253 = vmatpush.msra.mxu0 0.0
    %254 = vmatpush.msra.mxu0 0.0
    %255 = vmatpush.msra.mxu0 0.0
    %256 = vmatpush.msra.mxu0 0.0
    %257 = vmatpush.msra.mxu0 0.0
    %258 = vmatpush.msra.mxu0 0.0
    %259 = vmatpush.msra.mxu0 0.0
    %260 = vmatpush.msra.mxu0 %v239
    %261 = vmatpush.msra.mxu0 %v236
    %262 = vmatpush.msra.mxu0 %v233
    %263 = vmatpush.msra.mxu0 %v230
    %264 = vmatpush.msra.mxu0 %v227
    %265 = vmatpush.msra.mxu0 %v224
    %266 = vmatpush.msra.mxu0 %v221
    %267 = vmatmul.f32.gmra.mxu0 %v243
    %v268 = vpop.f32.mrf.mxu0
    %v269 = vadd.f32 0.0, %v268
    %270 = vmatmul.f32.gmra.mxu0 %v246
    %v271 = vpop.f32.mrf.mxu0
    %v272 = vadd.f32 0.0, %v271
    %273 = vmatmul.f32.gmra.mxu0 %v249
    %v274 = vpop.f32.mrf.mxu0
    %v275 = vadd.f32 0.0, %v274
    %276 = vdwg.mxu0
    %277 = vmatpush.msra.mxu0 0.0
    %278 = vmatpush.msra.mxu0 0.0
    %279 = vmatpush.msra.mxu0 0.0
    %280 = vmatpush.msra.mxu0 0.0
    %281 = vmatpush.msra.mxu0 0.0
    %282 = vmatpush.msra.mxu0 0.0
    %283 = vmatpush.msra.mxu0 0.0
    %284 = vmatpush.msra.mxu0 0.0
    %285 = vmatpush.msra.mxu0 0.0
    %286 = vmatpush.msra.mxu0 %v240
    %287 = vmatpush.msra.mxu0 %v237
    %288 = vmatpush.msra.mxu0 %v234
    %289 = vmatpush.msra.mxu0 %v231
    %290 = vmatpush.msra.mxu0 %v228
    %291 = vmatpush.msra.mxu0 %v225
    %292 = vmatpush.msra.mxu0 %v222
    %293 = vmatmul.f32.gmra.mxu0 %v243
    %v294 = vpop.f32.mrf.mxu0
    %v295 = vadd.f32 0.0, %v294
    %296 = vmatmul.f32.gmra.mxu0 %v246
    %v297 = vpop.f32.mrf.mxu0
    %v298 = vadd.f32 0.0, %v297
    %299 = vmatmul.f32.gmra.mxu0 %v249
    %v300 = vpop.f32.mrf.mxu0
    %v301 = vadd.f32 0.0, %v300
    %302 = vdwg.mxu0
    %303 = vmatpush.msra.mxu0 0.0
    %304 = vmatpush.msra.mxu0 0.0
    %305 = vmatpush.msra.mxu0 0.0
    %306 = vmatpush.msra.mxu0 0.0
    %307 = vmatpush.msra.mxu0 0.0
    %308 = vmatpush.msra.mxu0 0.0
    %309 = vmatpush.msra.mxu0 0.0
    %310 = vmatpush.msra.mxu0 0.0
    %311 = vmatpush.msra.mxu0 0.0
    %312 = vmatpush.msra.mxu0 %v241
    %313 = vmatpush.msra.mxu0 %v238
    %314 = vmatpush.msra.mxu0 %v235
    %315 = vmatpush.msra.mxu0 %v232
    %316 = vmatpush.msra.mxu0 %v229
    %317 = vmatpush.msra.mxu0 %v226
    %318 = vmatpush.msra.mxu0 %v223
    %319 = vmatmul.f32.gmra.mxu0 %v243
    %v320 = vpop.f32.mrf.mxu0
    %v321 = vadd.f32 0.0, %v320
    %322 = vmatmul.f32.gmra.mxu0 %v246
    %v323 = vpop.f32.mrf.mxu0
    %v324 = vadd.f32 0.0, %v323
    %325 = vmatmul.f32.gmra.mxu0 %v249
    %v326 = vpop.f32.mrf.mxu0
    %v327 = vadd.f32 0.0, %v326
    %328 = vdwg.mxu0
    %v329 = vld [vmem:[%s0 + $0x4] sm:$0xff]
    %v330 = vld [vmem:[%s0 + $0xc] sm:$0xff]
    %v331 = vld [vmem:[%s0 + $0x14] sm:$0xff]
    %s332 = scalar_lea.vmem %s1, 672
    %v333 = vld [vmem:[%s332] sm:$0xff]
    %v334 = vld [vmem:[%s332 + $0x8] sm:$0xff]
    %v335 = vld [vmem:[%s332 + $0x10] sm:$0xff]
    %v336 = vld [vmem:[%s332 + $0x18] sm:$0xff]
    %v337 = vld [vmem:[%s332 + $0x20] sm:$0xff]
    %v338 = vld [vmem:[%s332 + $0x28] sm:$0xff]
    %v339 = vld [vmem:[%s332 + $0x30] sm:$0xff]
    %v340 = vld [vmem:[%s332 + $0x38] sm:$0xff]
    %v341 = vld [vmem:[%s332 + $0x40] sm:$0xff]
    %v342 = vld [vmem:[%s332 + $0x48] sm:$0xff]
    %v343 = vld [vmem:[%s332 + $0x50] sm:$0xff]
    %v344 = vld [vmem:[%s332 + $0x58] sm:$0xff]
    %v345 = vld [vmem:[%s332 + $0x60] sm:$0xff]
    %v346 = vld [vmem:[%s332 + $0x68] sm:$0xff]
    %v347 = vld [vmem:[%s332 + $0x70] sm:$0xff]
    %v348 = vld [vmem:[%s332 + $0x78] sm:$0xff]
    %v349 = vld [vmem:[%s332 + $0x80] sm:$0xff]
    %v350 = vld [vmem:[%s332 + $0x88] sm:$0xff]
    %v351 = vld [vmem:[%s332 + $0x90] sm:$0xff]
    %v352 = vld [vmem:[%s332 + $0x98] sm:$0xff]
    %v353 = vld [vmem:[%s332 + $0xa0] sm:$0xff]
    %v355 = vsel %vm104, %v329, 0
    %v358 = vsel %vm104, %v330, 0
    %v361 = vsel %vm104, %v331, 0
    %363 = vmatpush.msra.mxu0 0.0
    %364 = vmatpush.msra.mxu0 0.0
    %365 = vmatpush.msra.mxu0 0.0
    %366 = vmatpush.msra.mxu0 0.0
    %367 = vmatpush.msra.mxu0 0.0
    %368 = vmatpush.msra.mxu0 0.0
    %369 = vmatpush.msra.mxu0 0.0
    %370 = vmatpush.msra.mxu0 0.0
    %371 = vmatpush.msra.mxu0 0.0
    %372 = vmatpush.msra.mxu0 %v351
    %373 = vmatpush.msra.mxu0 %v348
    %374 = vmatpush.msra.mxu0 %v345
    %375 = vmatpush.msra.mxu0 %v342
    %376 = vmatpush.msra.mxu0 %v339
    %377 = vmatpush.msra.mxu0 %v336
    %378 = vmatpush.msra.mxu0 %v333
    %379 = vmatmul.f32.gmra.mxu0 %v355
    %v380 = vpop.f32.mrf.mxu0
    %v381 = vadd.f32 0.0, %v380
    %382 = vmatmul.f32.gmra.mxu0 %v358
    %v383 = vpop.f32.mrf.mxu0
    %v384 = vadd.f32 0.0, %v383
    %385 = vmatmul.f32.gmra.mxu0 %v361
    %v386 = vpop.f32.mrf.mxu0
    %v387 = vadd.f32 0.0, %v386
    %388 = vdwg.mxu0
    %389 = vmatpush.msra.mxu0 0.0
    %390 = vmatpush.msra.mxu0 0.0
    %391 = vmatpush.msra.mxu0 0.0
    %392 = vmatpush.msra.mxu0 0.0
    %393 = vmatpush.msra.mxu0 0.0
    %394 = vmatpush.msra.mxu0 0.0
    %395 = vmatpush.msra.mxu0 0.0
    %396 = vmatpush.msra.mxu0 0.0
    %397 = vmatpush.msra.mxu0 0.0
    %398 = vmatpush.msra.mxu0 %v352
    %399 = vmatpush.msra.mxu0 %v349
    %400 = vmatpush.msra.mxu0 %v346
    %401 = vmatpush.msra.mxu0 %v343
    %402 = vmatpush.msra.mxu0 %v340
    %403 = vmatpush.msra.mxu0 %v337
    %404 = vmatpush.msra.mxu0 %v334
    %405 = vmatmul.f32.gmra.mxu0 %v355
    %v406 = vpop.f32.mrf.mxu0
    %v407 = vadd.f32 0.0, %v406
    %408 = vmatmul.f32.gmra.mxu0 %v358
    %v409 = vpop.f32.mrf.mxu0
    %v410 = vadd.f32 0.0, %v409
    %411 = vmatmul.f32.gmra.mxu0 %v361
    %v412 = vpop.f32.mrf.mxu0
    %v413 = vadd.f32 0.0, %v412
    %414 = vdwg.mxu0
    %415 = vmatpush.msra.mxu0 0.0
    %416 = vmatpush.msra.mxu0 0.0
    %417 = vmatpush.msra.mxu0 0.0
    %418 = vmatpush.msra.mxu0 0.0
    %419 = vmatpush.msra.mxu0 0.0
    %420 = vmatpush.msra.mxu0 0.0
    %421 = vmatpush.msra.mxu0 0.0
    %422 = vmatpush.msra.mxu0 0.0
    %423 = vmatpush.msra.mxu0 0.0
    %424 = vmatpush.msra.mxu0 %v353
    %425 = vmatpush.msra.mxu0 %v350
    %426 = vmatpush.msra.mxu0 %v347
    %427 = vmatpush.msra.mxu0 %v344
    %428 = vmatpush.msra.mxu0 %v341
    %429 = vmatpush.msra.mxu0 %v338
    %430 = vmatpush.msra.mxu0 %v335
    %431 = vmatmul.f32.gmra.mxu0 %v355
    %v432 = vpop.f32.mrf.mxu0
    %v433 = vadd.f32 0.0, %v432
    %434 = vmatmul.f32.gmra.mxu0 %v358
    %v435 = vpop.f32.mrf.mxu0
    %v436 = vadd.f32 0.0, %v435
    %437 = vmatmul.f32.gmra.mxu0 %v361
    %v438 = vpop.f32.mrf.mxu0
    %v439 = vadd.f32 0.0, %v438
    %440 = vdwg.mxu0
    %v442 = vsel %vm104, %v55, 0
    %v445 = vsel %vm104, %v56, 0
    %v448 = vsel %vm104, %v57, 0
    %450 = vmatpush.msra.mxu0 0.0
    %451 = vmatpush.msra.mxu0 0.0
    %452 = vmatpush.msra.mxu0 0.0
    %453 = vmatpush.msra.mxu0 0.0
    %454 = vmatpush.msra.mxu0 0.0
    %455 = vmatpush.msra.mxu0 0.0
    %456 = vmatpush.msra.mxu0 0.0
    %457 = vmatpush.msra.mxu0 0.0
    %458 = vmatpush.msra.mxu0 0.0
    %459 = vmatpush.msra.mxu0 %v76
    %460 = vmatpush.msra.mxu0 %v73
    %461 = vmatpush.msra.mxu0 %v70
    %462 = vmatpush.msra.mxu0 %v67
    %463 = vmatpush.msra.mxu0 %v64
    %464 = vmatpush.msra.mxu0 %v61
    %465 = vmatpush.msra.mxu0 %v58
    %466 = vmatmul.f32.gmra.mxu0 %v442
    %v467 = vpop.f32.mrf.mxu0
    %v468 = vadd.f32 %v132, %v467
    %469 = vmatmul.f32.gmra.mxu0 %v445
    %v470 = vpop.f32.mrf.mxu0
    %v471 = vadd.f32 %v135, %v470
    %472 = vmatmul.f32.gmra.mxu0 %v448
    %v473 = vpop.f32.mrf.mxu0
    %v474 = vadd.f32 %v138, %v473
    %475 = vdwg.mxu0
    %476 = vmatpush.msra.mxu0 0.0
    %477 = vmatpush.msra.mxu0 0.0
    %478 = vmatpush.msra.mxu0 0.0
    %479 = vmatpush.msra.mxu0 0.0
    %480 = vmatpush.msra.mxu0 0.0
    %481 = vmatpush.msra.mxu0 0.0
    %482 = vmatpush.msra.mxu0 0.0
    %483 = vmatpush.msra.mxu0 0.0
    %484 = vmatpush.msra.mxu0 0.0
    %485 = vmatpush.msra.mxu0 %v77
    %486 = vmatpush.msra.mxu0 %v74
    %487 = vmatpush.msra.mxu0 %v71
    %488 = vmatpush.msra.mxu0 %v68
    %489 = vmatpush.msra.mxu0 %v65
    %490 = vmatpush.msra.mxu0 %v62
    %491 = vmatpush.msra.mxu0 %v59
    %492 = vmatmul.f32.gmra.mxu0 %v442
    %v493 = vpop.f32.mrf.mxu0
    %v494 = vadd.f32 %v158, %v493
    %495 = vmatmul.f32.gmra.mxu0 %v445
    %v496 = vpop.f32.mrf.mxu0
    %v497 = vadd.f32 %v161, %v496
    %498 = vmatmul.f32.gmra.mxu0 %v448
    %v499 = vpop.f32.mrf.mxu0
    %v500 = vadd.f32 %v164, %v499
    %501 = vdwg.mxu0
    %502 = vmatpush.msra.mxu0 0.0
    %503 = vmatpush.msra.mxu0 0.0
    %504 = vmatpush.msra.mxu0 0.0
    %505 = vmatpush.msra.mxu0 0.0
    %506 = vmatpush.msra.mxu0 0.0
    %507 = vmatpush.msra.mxu0 0.0
    %508 = vmatpush.msra.mxu0 0.0
    %509 = vmatpush.msra.mxu0 0.0
    %510 = vmatpush.msra.mxu0 0.0
    %511 = vmatpush.msra.mxu0 %v78
    %512 = vmatpush.msra.mxu0 %v75
    %513 = vmatpush.msra.mxu0 %v72
    %514 = vmatpush.msra.mxu0 %v69
    %515 = vmatpush.msra.mxu0 %v66
    %516 = vmatpush.msra.mxu0 %v63
    %517 = vmatpush.msra.mxu0 %v60
    %518 = vmatmul.f32.gmra.mxu0 %v442
    %v519 = vpop.f32.mrf.mxu0
    %v520 = vadd.f32 %v184, %v519
    %521 = vmatmul.f32.gmra.mxu0 %v445
    %v522 = vpop.f32.mrf.mxu0
    %v523 = vadd.f32 %v187, %v522
    %524 = vmatmul.f32.gmra.mxu0 %v448
    %v525 = vpop.f32.mrf.mxu0
    %v526 = vadd.f32 %v190, %v525
    %527 = vdwg.mxu0
    %v529 = vsel %vm104, %v192, 0
    %v532 = vsel %vm104, %v193, 0
    %v535 = vsel %vm104, %v194, 0
    %537 = vmatpush.msra.mxu0 0.0
    %538 = vmatpush.msra.mxu0 0.0
    %539 = vmatpush.msra.mxu0 0.0
    %540 = vmatpush.msra.mxu0 0.0
    %541 = vmatpush.msra.mxu0 0.0
    %542 = vmatpush.msra.mxu0 0.0
    %543 = vmatpush.msra.mxu0 0.0
    %544 = vmatpush.msra.mxu0 0.0
    %545 = vmatpush.msra.mxu0 0.0
    %546 = vmatpush.msra.mxu0 %v214
    %547 = vmatpush.msra.mxu0 %v211
    %548 = vmatpush.msra.mxu0 %v208
    %549 = vmatpush.msra.mxu0 %v205
    %550 = vmatpush.msra.mxu0 %v202
    %551 = vmatpush.msra.mxu0 %v199
    %552 = vmatpush.msra.mxu0 %v196
    %553 = vmatmul.f32.gmra.mxu0 %v529
    %v554 = vpop.f32.mrf.mxu0
    %v555 = vadd.f32 %v269, %v554
    %556 = vmatmul.f32.gmra.mxu0 %v532
    %v557 = vpop.f32.mrf.mxu0
    %v558 = vadd.f32 %v272, %v557
    %559 = vmatmul.f32.gmra.mxu0 %v535
    %v560 = vpop.f32.mrf.mxu0
    %v561 = vadd.f32 %v275, %v560
    %562 = vdwg.mxu0
    %563 = vmatpush.msra.mxu0 0.0
    %564 = vmatpush.msra.mxu0 0.0
    %565 = vmatpush.msra.mxu0 0.0
    %566 = vmatpush.msra.mxu0 0.0
    %567 = vmatpush.msra.mxu0 0.0
    %568 = vmatpush.msra.mxu0 0.0
    %569 = vmatpush.msra.mxu0 0.0
    %570 = vmatpush.msra.mxu0 0.0
    %571 = vmatpush.msra.mxu0 0.0
    %572 = vmatpush.msra.mxu0 %v215
    %573 = vmatpush.msra.mxu0 %v212
    %574 = vmatpush.msra.mxu0 %v209
    %575 = vmatpush.msra.mxu0 %v206
    %576 = vmatpush.msra.mxu0 %v203
    %577 = vmatpush.msra.mxu0 %v200
    %578 = vmatpush.msra.mxu0 %v197
    %579 = vmatmul.f32.gmra.mxu0 %v529
    %v580 = vpop.f32.mrf.mxu0
    %v581 = vadd.f32 %v295, %v580
    %582 = vmatmul.f32.gmra.mxu0 %v532
    %v583 = vpop.f32.mrf.mxu0
    %v584 = vadd.f32 %v298, %v583
    %585 = vmatmul.f32.gmra.mxu0 %v535
    %v586 = vpop.f32.mrf.mxu0
    %v587 = vadd.f32 %v301, %v586
    %588 = vdwg.mxu0
    %589 = vmatpush.msra.mxu0 0.0
    %590 = vmatpush.msra.mxu0 0.0
    %591 = vmatpush.msra.mxu0 0.0
    %592 = vmatpush.msra.mxu0 0.0
    %593 = vmatpush.msra.mxu0 0.0
    %594 = vmatpush.msra.mxu0 0.0
    %595 = vmatpush.msra.mxu0 0.0
    %596 = vmatpush.msra.mxu0 0.0
    %597 = vmatpush.msra.mxu0 0.0
    %598 = vmatpush.msra.mxu0 %v216
    %599 = vmatpush.msra.mxu0 %v213
    %600 = vmatpush.msra.mxu0 %v210
    %601 = vmatpush.msra.mxu0 %v207
    %602 = vmatpush.msra.mxu0 %v204
    %603 = vmatpush.msra.mxu0 %v201
    %604 = vmatpush.msra.mxu0 %v198
    %605 = vmatmul.f32.gmra.mxu0 %v529
    %v606 = vpop.f32.mrf.mxu0
    %v607 = vadd.f32 %v321, %v606
    %608 = vmatmul.f32.gmra.mxu0 %v532
    %v609 = vpop.f32.mrf.mxu0
    %v610 = vadd.f32 %v324, %v609
    %611 = vmatmul.f32.gmra.mxu0 %v535
    %v612 = vpop.f32.mrf.mxu0
    %v613 = vadd.f32 %v327, %v612
    %614 = vdwg.mxu0
    %v615 = vadd.f32 %v468, %v555
    %v616 = vadd.f32 %v494, %v581
    %v617 = vadd.f32 %v520, %v607
    %v618 = vadd.f32 %v471, %v558
    %v619 = vadd.f32 %v497, %v584
    %v620 = vadd.f32 %v523, %v610
    %v621 = vadd.f32 %v474, %v561
    %v622 = vadd.f32 %v500, %v587
    %v623 = vadd.f32 %v526, %v613
    %v624 = vadd.f32 %v615, %v381
    %v625 = vadd.f32 %v616, %v407
    %v626 = vadd.f32 %v617, %v433
    %v627 = vadd.f32 %v618, %v384
    %v628 = vadd.f32 %v619, %v410
    %v629 = vadd.f32 %v620, %v436
    %v630 = vadd.f32 %v621, %v387
    %v631 = vadd.f32 %v622, %v413
    %v632 = vadd.f32 %v623, %v439
    %v633 = vld [vmem:[%s3] sm:$0xff]
    %v634 = vld [vmem:[%s3 + $0x8] sm:$0xf]
    %vm635 = vcmask 195584
    %v637 = vsel %vm635, %v633, 0
    %v640 = vsel %vm635, %v634, 0
    %642 = vmatpush.msra.mxu0 0.0
    %643 = vmatpush.msra.mxu0 0.0
    %644 = vmatpush.msra.mxu0 0.0
    %645 = vmatpush.msra.mxu0 0.0
    %646 = vmatpush.msra.mxu0 0.0
    %647 = vmatpush.msra.mxu0 0.0
    %648 = vmatpush.msra.mxu0 0.0
    %649 = vmatpush.msra.mxu0 0.0
    %650 = vmatpush.msra.mxu0 0.0
    %651 = vmatpush.msra.mxu0 0.0
    %652 = vmatpush.msra.mxu0 0.0
    %653 = vmatpush.msra.mxu0 0.0
    %654 = vmatpush.msra.mxu0 0.0
    %655 = vmatpush.msra.mxu0 %v630
    %656 = vmatpush.msra.mxu0 %v627
    %657 = vmatpush.msra.mxu0 %v624
    %658 = vmatmul.f32.gmra.mxu0 %v637
    %v659 = vpop.f32.mrf.mxu0
    %v660 = vadd.f32 0.0, %v659
    %661 = vmatmul.f32.gmra.mxu0 %v640
    %v662 = vpop.f32.mrf.mxu0
    %v663 = vadd.f32 0.0, %v662
    %664 = vdwg.mxu0
    %665 = vmatpush.msra.mxu0 0.0
    %666 = vmatpush.msra.mxu0 0.0
    %667 = vmatpush.msra.mxu0 0.0
    %668 = vmatpush.msra.mxu0 0.0
    %669 = vmatpush.msra.mxu0 0.0
    %670 = vmatpush.msra.mxu0 0.0
    %671 = vmatpush.msra.mxu0 0.0
    %672 = vmatpush.msra.mxu0 0.0
    %673 = vmatpush.msra.mxu0 0.0
    %674 = vmatpush.msra.mxu0 0.0
    %675 = vmatpush.msra.mxu0 0.0
    %676 = vmatpush.msra.mxu0 0.0
    %677 = vmatpush.msra.mxu0 0.0
    %678 = vmatpush.msra.mxu0 %v631
    %679 = vmatpush.msra.mxu0 %v628
    %680 = vmatpush.msra.mxu0 %v625
    %681 = vmatmul.f32.gmra.mxu0 %v637
    %v682 = vpop.f32.mrf.mxu0
    %v683 = vadd.f32 0.0, %v682
    %684 = vmatmul.f32.gmra.mxu0 %v640
    %v685 = vpop.f32.mrf.mxu0
    %v686 = vadd.f32 0.0, %v685
    %687 = vdwg.mxu0
    %688 = vmatpush.msra.mxu0 0.0
    %689 = vmatpush.msra.mxu0 0.0
    %690 = vmatpush.msra.mxu0 0.0
    %691 = vmatpush.msra.mxu0 0.0
    %692 = vmatpush.msra.mxu0 0.0
    %693 = vmatpush.msra.mxu0 0.0
    %694 = vmatpush.msra.mxu0 0.0
    %695 = vmatpush.msra.mxu0 0.0
    %696 = vmatpush.msra.mxu0 0.0
    %697 = vmatpush.msra.mxu0 0.0
    %698 = vmatpush.msra.mxu0 0.0
    %699 = vmatpush.msra.mxu0 0.0
    %700 = vmatpush.msra.mxu0 0.0
    %701 = vmatpush.msra.mxu0 %v632
    %702 = vmatpush.msra.mxu0 %v629
    %703 = vmatpush.msra.mxu0 %v626
    %704 = vmatmul.f32.gmra.mxu0 %v637
    %v705 = vpop.f32.mrf.mxu0
    %v706 = vadd.f32 0.0, %v705
    %707 = vmatmul.f32.gmra.mxu0 %v640
    %v708 = vpop.f32.mrf.mxu0
    %v709 = vadd.f32 0.0, %v708
    %710 = vdwg.mxu0
    %s711 = scalar_lea.vmem %s3, 16
    %v712 = vld [vmem:[%s711] sm:$0xff]
    %v713 = vld [vmem:[%s711 + $0x8] sm:$0xf]
    %v715 = vsel %vm635, %v712, 0
    %v718 = vsel %vm635, %v713, 0
    %720 = vmatpush.msra.mxu0 0.0
    %721 = vmatpush.msra.mxu0 0.0
    %722 = vmatpush.msra.mxu0 0.0
    %723 = vmatpush.msra.mxu0 0.0
    %724 = vmatpush.msra.mxu0 0.0
    %725 = vmatpush.msra.mxu0 0.0
    %726 = vmatpush.msra.mxu0 0.0
    %727 = vmatpush.msra.mxu0 0.0
    %728 = vmatpush.msra.mxu0 0.0
    %729 = vmatpush.msra.mxu0 0.0
    %730 = vmatpush.msra.mxu0 0.0
    %731 = vmatpush.msra.mxu0 0.0
    %732 = vmatpush.msra.mxu0 0.0
    %733 = vmatpush.msra.mxu0 %v630
    %734 = vmatpush.msra.mxu0 %v627
    %735 = vmatpush.msra.mxu0 %v624
    %736 = vmatmul.f32.gmra.mxu0 %v715
    %v737 = vpop.f32.mrf.mxu0
    %v738 = vadd.f32 0.0, %v737
    %739 = vmatmul.f32.gmra.mxu0 %v718
    %v740 = vpop.f32.mrf.mxu0
    %v741 = vadd.f32 0.0, %v740
    %742 = vdwg.mxu0
    %743 = vmatpush.msra.mxu0 0.0
    %744 = vmatpush.msra.mxu0 0.0
    %745 = vmatpush.msra.mxu0 0.0
    %746 = vmatpush.msra.mxu0 0.0
    %747 = vmatpush.msra.mxu0 0.0
    %748 = vmatpush.msra.mxu0 0.0
    %749 = vmatpush.msra.mxu0 0.0
    %750 = vmatpush.msra.mxu0 0.0
    %751 = vmatpush.msra.mxu0 0.0
    %752 = vmatpush.msra.mxu0 0.0
    %753 = vmatpush.msra.mxu0 0.0
    %754 = vmatpush.msra.mxu0 0.0
    %755 = vmatpush.msra.mxu0 0.0
    %756 = vmatpush.msra.mxu0 %v631
    %757 = vmatpush.msra.mxu0 %v628
    %758 = vmatpush.msra.mxu0 %v625
    %759 = vmatmul.f32.gmra.mxu0 %v715
    %v760 = vpop.f32.mrf.mxu0
    %v761 = vadd.f32 0.0, %v760
    %762 = vmatmul.f32.gmra.mxu0 %v718
    %v763 = vpop.f32.mrf.mxu0
    %v764 = vadd.f32 0.0, %v763
    %765 = vdwg.mxu0
    %766 = vmatpush.msra.mxu0 0.0
    %767 = vmatpush.msra.mxu0 0.0
    %768 = vmatpush.msra.mxu0 0.0
    %769 = vmatpush.msra.mxu0 0.0
    %770 = vmatpush.msra.mxu0 0.0
    %771 = vmatpush.msra.mxu0 0.0
    %772 = vmatpush.msra.mxu0 0.0
    %773 = vmatpush.msra.mxu0 0.0
    %774 = vmatpush.msra.mxu0 0.0
    %775 = vmatpush.msra.mxu0 0.0
    %776 = vmatpush.msra.mxu0 0.0
    %777 = vmatpush.msra.mxu0 0.0
    %778 = vmatpush.msra.mxu0 0.0
    %779 = vmatpush.msra.mxu0 %v632
    %780 = vmatpush.msra.mxu0 %v629
    %781 = vmatpush.msra.mxu0 %v626
    %782 = vmatmul.f32.gmra.mxu0 %v715
    %v783 = vpop.f32.mrf.mxu0
    %v784 = vadd.f32 0.0, %v783
    %785 = vmatmul.f32.gmra.mxu0 %v718
    %v786 = vpop.f32.mrf.mxu0
    %v787 = vadd.f32 0.0, %v786
    %788 = vdwg.mxu0
    %v789 = vmax.f32 %v660, %v738
    %v790 = vmax.f32 %v683, %v761
    %v791 = vmax.f32 %v706, %v784
    %v792 = vmax.f32 %v663, %v741
    %v793 = vmax.f32 %v686, %v764
    %v794 = vmax.f32 %v709, %v787
    %v795 = vld [vmem:[%s4] sm:$0xff]
    %v796 = vld [vmem:[%s4 + $0x8] sm:$0xff]
    %v797 = vld [vmem:[%s4 + $0x10] sm:$0xff]
    %v798 = vld [vmem:[%s4 + $0x18] sm:$0xff]
    %v799 = vld [vmem:[%s4 + $0x20] sm:$0xff]
    %v800 = vld [vmem:[%s4 + $0x28] sm:$0xff]
    %v801 = vld [vmem:[%s4 + $0x30] sm:$0xff]
    %v802 = vld [vmem:[%s4 + $0x38] sm:$0xff]
    %v803 = vld [vmem:[%s4 + $0x40] sm:$0xff]
    %v804 = vld [vmem:[%s4 + $0x48] sm:$0xff]
    %v805 = vld [vmem:[%s4 + $0x50] sm:$0xff]
    %v806 = vld [vmem:[%s4 + $0x58] sm:$0xff]
    %v807 = vld [vmem:[%s4 + $0x60] sm:$0xff]
    %v808 = vld [vmem:[%s4 + $0x68] sm:$0xff]
    %v809 = vld [vmem:[%s4 + $0x70] sm:$0xff]
    %v810 = vld [vmem:[%s4 + $0x78] sm:$0xff]
    %v811 = vld [vmem:[%s4 + $0x80] sm:$0xff]
    %v812 = vld [vmem:[%s4 + $0x88] sm:$0xff]
    %v813 = vld [vmem:[%s4 + $0x90] sm:$0xff]
    %v814 = vld [vmem:[%s4 + $0x98] sm:$0xff]
    %v815 = vld [vmem:[%s4 + $0xa0] sm:$0xff]
    %v816 = vld [vmem:[%s4 + $0xa8] sm:$0xff]
    %v817 = vld [vmem:[%s4 + $0xb0] sm:$0xff]
    %v818 = vld [vmem:[%s4 + $0xb8] sm:$0xff]
    %v819 = vld [vmem:[%s4 + $0xc0] sm:$0xff]
    %v820 = vld [vmem:[%s4 + $0xc8] sm:$0xff]
    %v821 = vld [vmem:[%s4 + $0xd0] sm:$0xff]
    %v822 = vld [vmem:[%s4 + $0xd8] sm:$0xff]
    %v823 = vld [vmem:[%s4 + $0xe0] sm:$0xff]
    %v824 = vld [vmem:[%s4 + $0xe8] sm:$0xff]
    %v825 = vld [vmem:[%s4 + $0xf0] sm:$0xff]
    %v826 = vld [vmem:[%s4 + $0xf8] sm:$0xff]
    %v827 = vld [vmem:[%s4 + $0x100] sm:$0xff]
    %v828 = vld [vmem:[%s4 + $0x108] sm:$0xff]
    %v829 = vld [vmem:[%s4 + $0x110] sm:$0xff]
    %v830 = vld [vmem:[%s4 + $0x118] sm:$0xff]
    %v831 = vld [vmem:[%s4 + $0x120] sm:$0xff]
    %v832 = vld [vmem:[%s4 + $0x128] sm:$0xff]
    %v833 = vld [vmem:[%s4 + $0x130] sm:$0xff]
    %v834 = vld [vmem:[%s4 + $0x138] sm:$0xff]
    %v835 = vld [vmem:[%s4 + $0x140] sm:$0xff]
    %v836 = vld [vmem:[%s4 + $0x148] sm:$0xff]
    %v837 = vld [vmem:[%s4 + $0x150] sm:$0xff]
    %v838 = vld [vmem:[%s4 + $0x158] sm:$0xff]
    %v839 = vld [vmem:[%s4 + $0x160] sm:$0xff]
    %v840 = vld [vmem:[%s4 + $0x168] sm:$0xff]
    %v841 = vld [vmem:[%s4 + $0x170] sm:$0xff]
    %v842 = vld [vmem:[%s4 + $0x178] sm:$0xff]
    %v843 = vld [vmem:[%s4 + $0x180] sm:$0xff]
    %v844 = vld [vmem:[%s4 + $0x188] sm:$0xff]
    %v845 = vld [vmem:[%s4 + $0x190] sm:$0xff]
    %v846 = vld [vmem:[%s4 + $0x198] sm:$0xff]
    %v847 = vld [vmem:[%s4 + $0x1a0] sm:$0xff]
    %v848 = vld [vmem:[%s4 + $0x1a8] sm:$0xff]
    %v849 = vld [vmem:[%s4 + $0x1b0] sm:$0xff]
    %v850 = vld [vmem:[%s4 + $0x1b8] sm:$0xff]
    %v851 = vld [vmem:[%s4 + $0x1c0] sm:$0xff]
    %v852 = vld [vmem:[%s4 + $0x1c8] sm:$0xff]
    %v853 = vld [vmem:[%s4 + $0x1d0] sm:$0xff]
    %v854 = vld [vmem:[%s4 + $0x1d8] sm:$0xff]
    %v855 = vld [vmem:[%s4 + $0x1e0] sm:$0xff]
    %v856 = vld [vmem:[%s4 + $0x1e8] sm:$0xff]
    %v857 = vld [vmem:[%s4 + $0x1f0] sm:$0xff]
    %v858 = vld [vmem:[%s4 + $0x1f8] sm:$0xff]
    %v859 = vld [vmem:[%s4 + $0x200] sm:$0xff]
    %v860 = vld [vmem:[%s4 + $0x208] sm:$0xff]
    %v861 = vld [vmem:[%s4 + $0x210] sm:$0xff]
    %v862 = vld [vmem:[%s4 + $0x218] sm:$0xff]
    %v863 = vld [vmem:[%s4 + $0x220] sm:$0xff]
    %v864 = vld [vmem:[%s4 + $0x228] sm:$0xff]
    %v865 = vld [vmem:[%s4 + $0x230] sm:$0xff]
    %v866 = vld [vmem:[%s4 + $0x238] sm:$0xff]
    %vm867 = vcmask 261120
    %v869 = vsel %vm867, %v791, 0
    %v872 = vsel %vm867, %v794, 0
    %874 = vmatpush.msra.mxu0 %v825
    %875 = vmatpush.msra.mxu0 %v823
    %876 = vmatpush.msra.mxu0 %v821
    %877 = vmatpush.msra.mxu0 %v819
    %878 = vmatpush.msra.mxu0 %v817
    %879 = vmatpush.msra.mxu0 %v815
    %880 = vmatpush.msra.mxu0 %v813
    %881 = vmatpush.msra.mxu0 %v811
    %882 = vmatpush.msra.mxu0 %v809
    %883 = vmatpush.msra.mxu0 %v807
    %884 = vmatpush.msra.mxu0 %v805
    %885 = vmatpush.msra.mxu0 %v803
    %886 = vmatpush.msra.mxu0 %v801
    %887 = vmatpush.msra.mxu0 %v799
    %888 = vmatpush.msra.mxu0 %v797
    %889 = vmatpush.msra.mxu0 %v795
    %890 = vmatmul.f32.gmra.mxu0 %v789
    %v891 = vpop.f32.mrf.mxu0
    %v892 = vadd.f32 0.0, %v891
    %893 = vmatmul.f32.gmra.mxu0 %v792
    %v894 = vpop.f32.mrf.mxu0
    %v895 = vadd.f32 0.0, %v894
    %896 = vdwg.mxu0
    %897 = vmatpush.msra.mxu0 %v857
    %898 = vmatpush.msra.mxu0 %v855
    %899 = vmatpush.msra.mxu0 %v853
    %900 = vmatpush.msra.mxu0 %v851
    %901 = vmatpush.msra.mxu0 %v849
    %902 = vmatpush.msra.mxu0 %v847
    %903 = vmatpush.msra.mxu0 %v845
    %904 = vmatpush.msra.mxu0 %v843
    %905 = vmatpush.msra.mxu0 %v841
    %906 = vmatpush.msra.mxu0 %v839
    %907 = vmatpush.msra.mxu0 %v837
    %908 = vmatpush.msra.mxu0 %v835
    %909 = vmatpush.msra.mxu0 %v833
    %910 = vmatpush.msra.mxu0 %v831
    %911 = vmatpush.msra.mxu0 %v829
    %912 = vmatpush.msra.mxu0 %v827
    %913 = vmatmul.f32.gmra.mxu0 %v790
    %v914 = vpop.f32.mrf.mxu0
    %v915 = vadd.f32 %v892, %v914
    %916 = vmatmul.f32.gmra.mxu0 %v793
    %v917 = vpop.f32.mrf.mxu0
    %v918 = vadd.f32 %v895, %v917
    %919 = vdwg.mxu0
    %920 = vmatpush.msra.mxu0 0.0
    %921 = vmatpush.msra.mxu0 0.0
    %922 = vmatpush.msra.mxu0 0.0
    %923 = vmatpush.msra.mxu0 0.0
    %924 = vmatpush.msra.mxu0 0.0
    %925 = vmatpush.msra.mxu0 0.0
    %926 = vmatpush.msra.mxu0 0.0
    %927 = vmatpush.msra.mxu0 0.0
    %928 = vmatpush.msra.mxu0 0.0
    %929 = vmatpush.msra.mxu0 0.0
    %930 = vmatpush.msra.mxu0 0.0
    %931 = vmatpush.msra.mxu0 0.0
    %932 = vmatpush.msra.mxu0 %v865
    %933 = vmatpush.msra.mxu0 %v863
    %934 = vmatpush.msra.mxu0 %v861
    %935 = vmatpush.msra.mxu0 %v859
    %936 = vmatmul.f32.gmra.mxu0 %v869
    %v937 = vpop.f32.mrf.mxu0
    %v938 = vadd.f32 %v915, %v937
    %939 = vmatmul.f32.gmra.mxu0 %v872
    %v940 = vpop.f32.mrf.mxu0
    %v941 = vadd.f32 %v918, %v940
    %942 = vdwg.mxu0
    %943 = vmatpush.msra.mxu0 %v826
    %944 = vmatpush.msra.mxu0 %v824
    %945 = vmatpush.msra.mxu0 %v822
    %946 = vmatpush.msra.mxu0 %v820
    %947 = vmatpush.msra.mxu0 %v818
    %948 = vmatpush.msra.mxu0 %v816
    %949 = vmatpush.msra.mxu0 %v814
    %950 = vmatpush.msra.mxu0 %v812
    %951 = vmatpush.msra.mxu0 %v810
    %952 = vmatpush.msra.mxu0 %v808
    %953 = vmatpush.msra.mxu0 %v806
    %954 = vmatpush.msra.mxu0 %v804
    %955 = vmatpush.msra.mxu0 %v802
    %956 = vmatpush.msra.mxu0 %v800
    %957 = vmatpush.msra.mxu0 %v798
    %958 = vmatpush.msra.mxu0 %v796
    %959 = vmatmul.f32.gmra.mxu0 %v789
    %v960 = vpop.f32.mrf.mxu0
    %v961 = vadd.f32 0.0, %v960
    %962 = vmatmul.f32.gmra.mxu0 %v792
    %v963 = vpop.f32.mrf.mxu0
    %v964 = vadd.f32 0.0, %v963
    %965 = vdwg.mxu0
    %966 = vmatpush.msra.mxu0 %v858
    %967 = vmatpush.msra.mxu0 %v856
    %968 = vmatpush.msra.mxu0 %v854
    %969 = vmatpush.msra.mxu0 %v852
    %970 = vmatpush.msra.mxu0 %v850
    %971 = vmatpush.msra.mxu0 %v848
    %972 = vmatpush.msra.mxu0 %v846
    %973 = vmatpush.msra.mxu0 %v844
    %974 = vmatpush.msra.mxu0 %v842
    %975 = vmatpush.msra.mxu0 %v840
    %976 = vmatpush.msra.mxu0 %v838
    %977 = vmatpush.msra.mxu0 %v836
    %978 = vmatpush.msra.mxu0 %v834
    %979 = vmatpush.msra.mxu0 %v832
    %980 = vmatpush.msra.mxu0 %v830
    %981 = vmatpush.msra.mxu0 %v828
    %982 = vmatmul.f32.gmra.mxu0 %v790
    %v983 = vpop.f32.mrf.mxu0
    %v984 = vadd.f32 %v961, %v983
    %985 = vmatmul.f32.gmra.mxu0 %v793
    %v986 = vpop.f32.mrf.mxu0
    %v987 = vadd.f32 %v964, %v986
    %988 = vdwg.mxu0
    %989 = vmatpush.msra.mxu0 0.0
    %990 = vmatpush.msra.mxu0 0.0
    %991 = vmatpush.msra.mxu0 0.0
    %992 = vmatpush.msra.mxu0 0.0
    %993 = vmatpush.msra.mxu0 0.0
    %994 = vmatpush.msra.mxu0 0.0
    %995 = vmatpush.msra.mxu0 0.0
    %996 = vmatpush.msra.mxu0 0.0
    %997 = vmatpush.msra.mxu0 0.0
    %998 = vmatpush.msra.mxu0 0.0
    %999 = vmatpush.msra.mxu0 0.0
    %1000 = vmatpush.msra.mxu0 0.0
    %1001 = vmatpush.msra.mxu0 %v866
    %1002 = vmatpush.msra.mxu0 %v864
    %1003 = vmatpush.msra.mxu0 %v862
    %1004 = vmatpush.msra.mxu0 %v860
    %1005 = vmatmul.f32.gmra.mxu0 %v869
    %v1006 = vpop.f32.mrf.mxu0
    %v1007 = vadd.f32 %v984, %v1006
    %1008 = vmatmul.f32.gmra.mxu0 %v872
    %v1009 = vpop.f32.mrf.mxu0
    %v1010 = vadd.f32 %v987, %v1009
    %1011 = vdwg.mxu0
    %s1012 = scalar_lea.vmem %s4, 576
    %v1013 = vld [vmem:[%s1012] sm:$0xff]
    %v1014 = vld [vmem:[%s1012 + $0x8] sm:$0xff]
    %v1015 = vld [vmem:[%s1012 + $0x10] sm:$0xff]
    %v1016 = vld [vmem:[%s1012 + $0x18] sm:$0xff]
    %v1017 = vld [vmem:[%s1012 + $0x20] sm:$0xff]
    %v1018 = vld [vmem:[%s1012 + $0x28] sm:$0xff]
    %v1019 = vld [vmem:[%s1012 + $0x30] sm:$0xff]
    %v1020 = vld [vmem:[%s1012 + $0x38] sm:$0xff]
    %v1021 = vld [vmem:[%s1012 + $0x40] sm:$0xff]
    %v1022 = vld [vmem:[%s1012 + $0x48] sm:$0xff]
    %v1023 = vld [vmem:[%s1012 + $0x50] sm:$0xff]
    %v1024 = vld [vmem:[%s1012 + $0x58] sm:$0xff]
    %v1025 = vld [vmem:[%s1012 + $0x60] sm:$0xff]
    %v1026 = vld [vmem:[%s1012 + $0x68] sm:$0xff]
    %v1027 = vld [vmem:[%s1012 + $0x70] sm:$0xff]
    %v1028 = vld [vmem:[%s1012 + $0x78] sm:$0xff]
    %v1029 = vld [vmem:[%s1012 + $0x80] sm:$0xff]
    %v1030 = vld [vmem:[%s1012 + $0x88] sm:$0xff]
    %v1031 = vld [vmem:[%s1012 + $0x90] sm:$0xff]
    %v1032 = vld [vmem:[%s1012 + $0x98] sm:$0xff]
    %v1033 = vld [vmem:[%s1012 + $0xa0] sm:$0xff]
    %v1034 = vld [vmem:[%s1012 + $0xa8] sm:$0xff]
    %v1035 = vld [vmem:[%s1012 + $0xb0] sm:$0xff]
    %v1036 = vld [vmem:[%s1012 + $0xb8] sm:$0xff]
    %v1037 = vld [vmem:[%s1012 + $0xc0] sm:$0xff]
    %v1038 = vld [vmem:[%s1012 + $0xc8] sm:$0xff]
    %v1039 = vld [vmem:[%s1012 + $0xd0] sm:$0xff]
    %v1040 = vld [vmem:[%s1012 + $0xd8] sm:$0xff]
    %v1041 = vld [vmem:[%s1012 + $0xe0] sm:$0xff]
    %v1042 = vld [vmem:[%s1012 + $0xe8] sm:$0xff]
    %v1043 = vld [vmem:[%s1012 + $0xf0] sm:$0xff]
    %v1044 = vld [vmem:[%s1012 + $0xf8] sm:$0xff]
    %v1045 = vld [vmem:[%s1012 + $0x100] sm:$0xff]
    %v1046 = vld [vmem:[%s1012 + $0x108] sm:$0xff]
    %v1047 = vld [vmem:[%s1012 + $0x110] sm:$0xff]
    %v1048 = vld [vmem:[%s1012 + $0x118] sm:$0xff]
    %v1049 = vld [vmem:[%s1012 + $0x120] sm:$0xff]
    %v1050 = vld [vmem:[%s1012 + $0x128] sm:$0xff]
    %v1051 = vld [vmem:[%s1012 + $0x130] sm:$0xff]
    %v1052 = vld [vmem:[%s1012 + $0x138] sm:$0xff]
    %v1053 = vld [vmem:[%s1012 + $0x140] sm:$0xff]
    %v1054 = vld [vmem:[%s1012 + $0x148] sm:$0xff]
    %v1055 = vld [vmem:[%s1012 + $0x150] sm:$0xff]
    %v1056 = vld [vmem:[%s1012 + $0x158] sm:$0xff]
    %v1057 = vld [vmem:[%s1012 + $0x160] sm:$0xff]
    %v1058 = vld [vmem:[%s1012 + $0x168] sm:$0xff]
    %v1059 = vld [vmem:[%s1012 + $0x170] sm:$0xff]
    %v1060 = vld [vmem:[%s1012 + $0x178] sm:$0xff]
    %v1061 = vld [vmem:[%s1012 + $0x180] sm:$0xff]
    %v1062 = vld [vmem:[%s1012 + $0x188] sm:$0xff]
    %v1063 = vld [vmem:[%s1012 + $0x190] sm:$0xff]
    %v1064 = vld [vmem:[%s1012 + $0x198] sm:$0xff]
    %v1065 = vld [vmem:[%s1012 + $0x1a0] sm:$0xff]
    %v1066 = vld [vmem:[%s1012 + $0x1a8] sm:$0xff]
    %v1067 = vld [vmem:[%s1012 + $0x1b0] sm:$0xff]
    %v1068 = vld [vmem:[%s1012 + $0x1b8] sm:$0xff]
    %v1069 = vld [vmem:[%s1012 + $0x1c0] sm:$0xff]
    %v1070 = vld [vmem:[%s1012 + $0x1c8] sm:$0xff]
    %v1071 = vld [vmem:[%s1012 + $0x1d0] sm:$0xff]
    %v1072 = vld [vmem:[%s1012 + $0x1d8] sm:$0xff]
    %v1073 = vld [vmem:[%s1012 + $0x1e0] sm:$0xff]
    %v1074 = vld [vmem:[%s1012 + $0x1e8] sm:$0xff]
    %v1075 = vld [vmem:[%s1012 + $0x1f0] sm:$0xff]
    %v1076 = vld [vmem:[%s1012 + $0x1f8] sm:$0xff]
    %v1077 = vld [vmem:[%s1012 + $0x200] sm:$0xff]
    %v1078 = vld [vmem:[%s1012 + $0x208] sm:$0xff]
    %v1079 = vld [vmem:[%s1012 + $0x210] sm:$0xff]
    %v1080 = vld [vmem:[%s1012 + $0x218] sm:$0xff]
    %v1081 = vld [vmem:[%s1012 + $0x220] sm:$0xff]
    %v1082 = vld [vmem:[%s1012 + $0x228] sm:$0xff]
    %v1083 = vld [vmem:[%s1012 + $0x230] sm:$0xff]
    %v1084 = vld [vmem:[%s1012 + $0x238] sm:$0xff]
    %1085 = vmatpush.msra.mxu0 %v1043
    %1086 = vmatpush.msra.mxu0 %v1041
    %1087 = vmatpush.msra.mxu0 %v1039
    %1088 = vmatpush.msra.mxu0 %v1037
    %1089 = vmatpush.msra.mxu0 %v1035
    %1090 = vmatpush.msra.mxu0 %v1033
    %1091 = vmatpush.msra.mxu0 %v1031
    %1092 = vmatpush.msra.mxu0 %v1029
    %1093 = vmatpush.msra.mxu0 %v1027
    %1094 = vmatpush.msra.mxu0 %v1025
    %1095 = vmatpush.msra.mxu0 %v1023
    %1096 = vmatpush.msra.mxu0 %v1021
    %1097 = vmatpush.msra.mxu0 %v1019
    %1098 = vmatpush.msra.mxu0 %v1017
    %1099 = vmatpush.msra.mxu0 %v1015
    %1100 = vmatpush.msra.mxu0 %v1013
    %1101 = vmatmul.f32.gmra.mxu0 %v789
    %v1102 = vpop.f32.mrf.mxu0
    %v1103 = vadd.f32 0.0, %v1102
    %1104 = vmatmul.f32.gmra.mxu0 %v792
    %v1105 = vpop.f32.mrf.mxu0
    %v1106 = vadd.f32 0.0, %v1105
    %1107 = vdwg.mxu0
    %1108 = vmatpush.msra.mxu0 %v1075
    %1109 = vmatpush.msra.mxu0 %v1073
    %1110 = vmatpush.msra.mxu0 %v1071
    %1111 = vmatpush.msra.mxu0 %v1069
    %1112 = vmatpush.msra.mxu0 %v1067
    %1113 = vmatpush.msra.mxu0 %v1065
    %1114 = vmatpush.msra.mxu0 %v1063
    %1115 = vmatpush.msra.mxu0 %v1061
    %1116 = vmatpush.msra.mxu0 %v1059
    %1117 = vmatpush.msra.mxu0 %v1057
    %1118 = vmatpush.msra.mxu0 %v1055
    %1119 = vmatpush.msra.mxu0 %v1053
    %1120 = vmatpush.msra.mxu0 %v1051
    %1121 = vmatpush.msra.mxu0 %v1049
    %1122 = vmatpush.msra.mxu0 %v1047
    %1123 = vmatpush.msra.mxu0 %v1045
    %1124 = vmatmul.f32.gmra.mxu0 %v790
    %v1125 = vpop.f32.mrf.mxu0
    %v1126 = vadd.f32 %v1103, %v1125
    %1127 = vmatmul.f32.gmra.mxu0 %v793
    %v1128 = vpop.f32.mrf.mxu0
    %v1129 = vadd.f32 %v1106, %v1128
    %1130 = vdwg.mxu0
    %1131 = vmatpush.msra.mxu0 0.0
    %1132 = vmatpush.msra.mxu0 0.0
    %1133 = vmatpush.msra.mxu0 0.0
    %1134 = vmatpush.msra.mxu0 0.0
    %1135 = vmatpush.msra.mxu0 0.0
    %1136 = vmatpush.msra.mxu0 0.0
    %1137 = vmatpush.msra.mxu0 0.0
    %1138 = vmatpush.msra.mxu0 0.0
    %1139 = vmatpush.msra.mxu0 0.0
    %1140 = vmatpush.msra.mxu0 0.0
    %1141 = vmatpush.msra.mxu0 0.0
    %1142 = vmatpush.msra.mxu0 0.0
    %1143 = vmatpush.msra.mxu0 %v1083
    %1144 = vmatpush.msra.mxu0 %v1081
    %1145 = vmatpush.msra.mxu0 %v1079
    %1146 = vmatpush.msra.mxu0 %v1077
    %1147 = vmatmul.f32.gmra.mxu0 %v869
    %v1148 = vpop.f32.mrf.mxu0
    %v1149 = vadd.f32 %v1126, %v1148
    %1150 = vmatmul.f32.gmra.mxu0 %v872
    %v1151 = vpop.f32.mrf.mxu0
    %v1152 = vadd.f32 %v1129, %v1151
    %1153 = vdwg.mxu0
    %1154 = vmatpush.msra.mxu0 %v1044
    %1155 = vmatpush.msra.mxu0 %v1042
    %1156 = vmatpush.msra.mxu0 %v1040
    %1157 = vmatpush.msra.mxu0 %v1038
    %1158 = vmatpush.msra.mxu0 %v1036
    %1159 = vmatpush.msra.mxu0 %v1034
    %1160 = vmatpush.msra.mxu0 %v1032
    %1161 = vmatpush.msra.mxu0 %v1030
    %1162 = vmatpush.msra.mxu0 %v1028
    %1163 = vmatpush.msra.mxu0 %v1026
    %1164 = vmatpush.msra.mxu0 %v1024
    %1165 = vmatpush.msra.mxu0 %v1022
    %1166 = vmatpush.msra.mxu0 %v1020
    %1167 = vmatpush.msra.mxu0 %v1018
    %1168 = vmatpush.msra.mxu0 %v1016
    %1169 = vmatpush.msra.mxu0 %v1014
    %1170 = vmatmul.f32.gmra.mxu0 %v789
    %v1171 = vpop.f32.mrf.mxu0
    %v1172 = vadd.f32 0.0, %v1171
    %1173 = vmatmul.f32.gmra.mxu0 %v792
    %v1174 = vpop.f32.mrf.mxu0
    %v1175 = vadd.f32 0.0, %v1174
    %1176 = vdwg.mxu0
    %1177 = vmatpush.msra.mxu0 %v1076
    %1178 = vmatpush.msra.mxu0 %v1074
    %1179 = vmatpush.msra.mxu0 %v1072
    %1180 = vmatpush.msra.mxu0 %v1070
    %1181 = vmatpush.msra.mxu0 %v1068
    %1182 = vmatpush.msra.mxu0 %v1066
    %1183 = vmatpush.msra.mxu0 %v1064
    %1184 = vmatpush.msra.mxu0 %v1062
    %1185 = vmatpush.msra.mxu0 %v1060
    %1186 = vmatpush.msra.mxu0 %v1058
    %1187 = vmatpush.msra.mxu0 %v1056
    %1188 = vmatpush.msra.mxu0 %v1054
    %1189 = vmatpush.msra.mxu0 %v1052
    %1190 = vmatpush.msra.mxu0 %v1050
    %1191 = vmatpush.msra.mxu0 %v1048
    %1192 = vmatpush.msra.mxu0 %v1046
    %1193 = vmatmul.f32.gmra.mxu0 %v790
    %v1194 = vpop.f32.mrf.mxu0
    %v1195 = vadd.f32 %v1172, %v1194
    %1196 = vmatmul.f32.gmra.mxu0 %v793
    %v1197 = vpop.f32.mrf.mxu0
    %v1198 = vadd.f32 %v1175, %v1197
    %1199 = vdwg.mxu0
    %1200 = vmatpush.msra.mxu0 0.0
    %1201 = vmatpush.msra.mxu0 0.0
    %1202 = vmatpush.msra.mxu0 0.0
    %1203 = vmatpush.msra.mxu0 0.0
    %1204 = vmatpush.msra.mxu0 0.0
    %1205 = vmatpush.msra.mxu0 0.0
    %1206 = vmatpush.msra.mxu0 0.0
    %1207 = vmatpush.msra.mxu0 0.0
    %1208 = vmatpush.msra.mxu0 0.0
    %1209 = vmatpush.msra.mxu0 0.0
    %1210 = vmatpush.msra.mxu0 0.0
    %1211 = vmatpush.msra.mxu0 0.0
    %1212 = vmatpush.msra.mxu0 %v1084
    %1213 = vmatpush.msra.mxu0 %v1082
    %1214 = vmatpush.msra.mxu0 %v1080
    %1215 = vmatpush.msra.mxu0 %v1078
    %1216 = vmatmul.f32.gmra.mxu0 %v869
    %v1217 = vpop.f32.mrf.mxu0
    %v1218 = vadd.f32 %v1195, %v1217
    %1219 = vmatmul.f32.gmra.mxu0 %v872
    %v1220 = vpop.f32.mrf.mxu0
    %v1221 = vadd.f32 %v1198, %v1220
    %1222 = vdwg.mxu0
    %v1223 = vmax.f32 %v938, %v1149
    %v1224 = vmax.f32 %v1007, %v1218
    %v1225 = vmax.f32 %v941, %v1152
    %v1226 = vmax.f32 %v1010, %v1221
    %v1227 = vld [vmem:[%s7] ss:$8 sm:$0x3]
    %v1229 = vperm.slane %v1227, 0
    %v1230 = vperm.slane %v1227, 1
    %v1233 = vadd.f32 %v1223, %v1229
    %v1234 = vadd.f32 %v1224, %v1230
    %v1235 = vadd.f32 %v1225, %v1229
    %v1236 = vadd.f32 %v1226, %v1230
    %v1237 = vmax.f32 %v1233, 0.0
    %v1238 = vmax.f32 %v1234, 0.0
    %v1239 = vmax.f32 %v1235, 0.0
    %v1240 = vmax.f32 %v1236, 0.0
    %1241 = vst [vmem:[#allocation2] sm:$0xff] %v1237
    %vm1242 = vcmask 130048
    %1243 = vst.msk [vmem:[#allocation2 + $0x8] sm:$0xff] %vm1242, %v1238
    %1244 = vst [vmem:[#allocation2 + $0x10] sm:$0xf] %v1239
    %vm1245 = vcmask 125952
    %1246 = vst.msk [vmem:[#allocation2 + $0x18] sm:$0xf] %vm1245, %v1240
    %v1247 = vld [vmem:[#allocation2] sm:$0xff]
    %v1248 = vld [vmem:[#allocation2 + $0x8] sm:$0xff]
    %v1249 = vld [vmem:[%s2] sm:$0xff]
    %v1250 = vld [vmem:[%s2 + $0x8] sm:$0xff]
    %v1251 = vld [vmem:[%s2 + $0x10] sm:$0xff]
    %v1252 = vld [vmem:[%s2 + $0x18] sm:$0xff]
    %v1253 = vld [vmem:[%s2 + $0x20] sm:$0xff]
    %v1254 = vld [vmem:[%s2 + $0x28] sm:$0xff]
    %v1255 = vld [vmem:[%s2 + $0x30] sm:$0xff]
    %v1256 = vld [vmem:[%s2 + $0x38] sm:$0xff]
    %v1257 = vld [vmem:[%s2 + $0x40] sm:$0xff]
    %v1258 = vld [vmem:[%s2 + $0x48] sm:$0xff]
    %v1259 = vld [vmem:[%s2 + $0x50] sm:$0xff]
    %v1260 = vld [vmem:[%s2 + $0x58] sm:$0xff]
    %v1261 = vld [vmem:[%s2 + $0x60] sm:$0xff]
    %v1262 = vld [vmem:[%s2 + $0x68] sm:$0xff]
    %v1263 = vld [vmem:[%s2 + $0x70] sm:$0xff]
    %v1264 = vld [vmem:[%s2 + $0x78] sm:$0xff]
    %v1265 = vld [vmem:[%s2 + $0x80] sm:$0xff]
    %v1266 = vld [vmem:[%s2 + $0x88] sm:$0xff]
    %v1267 = vld [vmem:[%s2 + $0x90] sm:$0xff]
    %v1268 = vld [vmem:[%s2 + $0x98] sm:$0xff]
    %v1269 = vld [vmem:[%s2 + $0xa0] sm:$0xff]
    %v1270 = vld [vmem:[%s2 + $0xa8] sm:$0xff]
    %v1271 = vld [vmem:[%s2 + $0xb0] sm:$0xff]
    %v1272 = vld [vmem:[%s2 + $0xb8] sm:$0xff]
    %v1273 = vld [vmem:[%s2 + $0xc0] sm:$0xff]
    %v1274 = vld [vmem:[%s2 + $0xc8] sm:$0xff]
    %v1275 = vld [vmem:[%s2 + $0xd0] sm:$0xff]
    %v1276 = vld [vmem:[%s2 + $0xd8] sm:$0xff]
    %v1277 = vld [vmem:[%s2 + $0xe0] sm:$0xff]
    %v1278 = vld [vmem:[%s2 + $0xe8] sm:$0xff]
    %v1279 = vld [vmem:[%s2 + $0xf0] sm:$0xff]
    %v1280 = vld [vmem:[%s2 + $0xf8] sm:$0xff]
    %v1281 = vld [vmem:[%s2 + $0x100] sm:$0xff]
    %v1282 = vld [vmem:[%s2 + $0x108] sm:$0xff]
    %v1283 = vld [vmem:[%s2 + $0x110] sm:$0xff]
    %v1284 = vld [vmem:[%s2 + $0x118] sm:$0xff]
    %v1285 = vld [vmem:[#allocation2] sm:$0xfe]
    %v1286 = vld [vmem:[#allocation2 + $0x8] sm:$0xfe]
    %v1287 = vld [vmem:[#allocation2 + $0x10] sm:$0x1]
    %v1288 = vld [vmem:[#allocation2 + $0x18] sm:$0x1]
    %s1289 = scalar_lea.vmem %s2, 288
    %v1290 = vld [vmem:[%s1289] sm:$0xff]
    %v1291 = vld [vmem:[%s1289 + $0x8] sm:$0xff]
    %v1292 = vld [vmem:[%s1289 + $0x10] sm:$0xff]
    %v1293 = vld [vmem:[%s1289 + $0x18] sm:$0xff]
    %v1294 = vld [vmem:[%s1289 + $0x20] sm:$0xff]
    %v1295 = vld [vmem:[%s1289 + $0x28] sm:$0xff]
    %v1296 = vld [vmem:[%s1289 + $0x30] sm:$0xff]
    %v1297 = vld [vmem:[%s1289 + $0x38] sm:$0xff]
    %v1298 = vld [vmem:[%s1289 + $0x40] sm:$0xff]
    %v1299 = vld [vmem:[%s1289 + $0x48] sm:$0xff]
    %v1300 = vld [vmem:[%s1289 + $0x50] sm:$0xff]
    %v1301 = vld [vmem:[%s1289 + $0x58] sm:$0xff]
    %v1302 = vld [vmem:[%s1289 + $0x60] sm:$0xff]
    %v1303 = vld [vmem:[%s1289 + $0x68] sm:$0xff]
    %v1304 = vld [vmem:[%s1289 + $0x70] sm:$0xff]
    %v1305 = vld [vmem:[%s1289 + $0x78] sm:$0xff]
    %v1306 = vld [vmem:[%s1289 + $0x80] sm:$0xff]
    %v1307 = vld [vmem:[%s1289 + $0x88] sm:$0xff]
    %v1308 = vld [vmem:[%s1289 + $0x90] sm:$0xff]
    %v1309 = vld [vmem:[%s1289 + $0x98] sm:$0xff]
    %v1310 = vld [vmem:[%s1289 + $0xa0] sm:$0xff]
    %v1311 = vld [vmem:[%s1289 + $0xa8] sm:$0xff]
    %v1312 = vld [vmem:[%s1289 + $0xb0] sm:$0xff]
    %v1313 = vld [vmem:[%s1289 + $0xb8] sm:$0xff]
    %v1314 = vld [vmem:[%s1289 + $0xc0] sm:$0xff]
    %v1315 = vld [vmem:[%s1289 + $0xc8] sm:$0xff]
    %v1316 = vld [vmem:[%s1289 + $0xd0] sm:$0xff]
    %v1317 = vld [vmem:[%s1289 + $0xd8] sm:$0xff]
    %v1318 = vld [vmem:[%s1289 + $0xe0] sm:$0xff]
    %v1319 = vld [vmem:[%s1289 + $0xe8] sm:$0xff]
    %v1320 = vld [vmem:[%s1289 + $0xf0] sm:$0xff]
    %v1321 = vld [vmem:[%s1289 + $0xf8] sm:$0xff]
    %v1322 = vld [vmem:[%s1289 + $0x100] sm:$0xff]
    %v1323 = vld [vmem:[%s1289 + $0x108] sm:$0xff]
    %v1324 = vld [vmem:[%s1289 + $0x110] sm:$0xff]
    %v1325 = vld [vmem:[%s1289 + $0x118] sm:$0xff]
    %vm1330 = vcmask 1046528
    %v1331 = vrot.slane %v1285, 1
    %v1332 = vrot.slane %v1287, 1
    %v1333 = vsel %vm1330, %v1331, %v1332
    %v1334 = vrot.slane %v1286, 1
    %v1335 = vrot.slane %v1288, 1
    %v1336 = vsel %vm1330, %v1334, %v1335
    %v1338 = vsel %vm1242, %v1336, 0
    %1340 = vmatpush.msra.mxu0 %v1320
    %1341 = vmatpush.msra.mxu0 %v1318
    %1342 = vmatpush.msra.mxu0 %v1316
    %1343 = vmatpush.msra.mxu0 %v1314
    %1344 = vmatpush.msra.mxu0 %v1312
    %1345 = vmatpush.msra.mxu0 %v1310
    %1346 = vmatpush.msra.mxu0 %v1308
    %1347 = vmatpush.msra.mxu0 %v1306
    %1348 = vmatpush.msra.mxu0 %v1304
    %1349 = vmatpush.msra.mxu0 %v1302
    %1350 = vmatpush.msra.mxu0 %v1300
    %1351 = vmatpush.msra.mxu0 %v1298
    %1352 = vmatpush.msra.mxu0 %v1296
    %1353 = vmatpush.msra.mxu0 %v1294
    %1354 = vmatpush.msra.mxu0 %v1292
    %1355 = vmatpush.msra.mxu0 %v1290
    %1356 = vmatmul.f32.gmra.mxu0 %v1333
    %v1357 = vpop.f32.mrf.mxu0
    %v1358 = vadd.f32 0.0, %v1357
    %1359 = vdwg.mxu0
    %1360 = vmatpush.msra.mxu0 0.0
    %1361 = vmatpush.msra.mxu0 0.0
    %1362 = vmatpush.msra.mxu0 0.0
    %1363 = vmatpush.msra.mxu0 0.0
    %1364 = vmatpush.msra.mxu0 0.0
    %1365 = vmatpush.msra.mxu0 0.0
    %1366 = vmatpush.msra.mxu0 0.0
    %1367 = vmatpush.msra.mxu0 0.0
    %1368 = vmatpush.msra.mxu0 0.0
    %1369 = vmatpush.msra.mxu0 0.0
    %1370 = vmatpush.msra.mxu0 0.0
    %1371 = vmatpush.msra.mxu0 0.0
    %1372 = vmatpush.msra.mxu0 0.0
    %1373 = vmatpush.msra.mxu0 0.0
    %1374 = vmatpush.msra.mxu0 %v1324
    %1375 = vmatpush.msra.mxu0 %v1322
    %1376 = vmatmul.f32.gmra.mxu0 %v1338
    %v1377 = vpop.f32.mrf.mxu0
    %v1378 = vadd.f32 %v1358, %v1377
    %1379 = vdwg.mxu0
    %1380 = vmatpush.msra.mxu0 %v1321
    %1381 = vmatpush.msra.mxu0 %v1319
    %1382 = vmatpush.msra.mxu0 %v1317
    %1383 = vmatpush.msra.mxu0 %v1315
    %1384 = vmatpush.msra.mxu0 %v1313
    %1385 = vmatpush.msra.mxu0 %v1311
    %1386 = vmatpush.msra.mxu0 %v1309
    %1387 = vmatpush.msra.mxu0 %v1307
    %1388 = vmatpush.msra.mxu0 %v1305
    %1389 = vmatpush.msra.mxu0 %v1303
    %1390 = vmatpush.msra.mxu0 %v1301
    %1391 = vmatpush.msra.mxu0 %v1299
    %1392 = vmatpush.msra.mxu0 %v1297
    %1393 = vmatpush.msra.mxu0 %v1295
    %1394 = vmatpush.msra.mxu0 %v1293
    %1395 = vmatpush.msra.mxu0 %v1291
    %1396 = vmatmul.f32.gmra.mxu0 %v1333
    %v1397 = vpop.f32.mrf.mxu0
    %v1398 = vadd.f32 0.0, %v1397
    %1399 = vdwg.mxu0
    %1400 = vmatpush.msra.mxu0 0.0
    %1401 = vmatpush.msra.mxu0 0.0
    %1402 = vmatpush.msra.mxu0 0.0
    %1403 = vmatpush.msra.mxu0 0.0
    %1404 = vmatpush.msra.mxu0 0.0
    %1405 = vmatpush.msra.mxu0 0.0
    %1406 = vmatpush.msra.mxu0 0.0
    %1407 = vmatpush.msra.mxu0 0.0
    %1408 = vmatpush.msra.mxu0 0.0
    %1409 = vmatpush.msra.mxu0 0.0
    %1410 = vmatpush.msra.mxu0 0.0
    %1411 = vmatpush.msra.mxu0 0.0
    %1412 = vmatpush.msra.mxu0 0.0
    %1413 = vmatpush.msra.mxu0 0.0
    %1414 = vmatpush.msra.mxu0 %v1325
    %1415 = vmatpush.msra.mxu0 %v1323
    %1416 = vmatmul.f32.gmra.mxu0 %v1338
    %v1417 = vpop.f32.mrf.mxu0
    %v1418 = vadd.f32 %v1398, %v1417
    %1419 = vdwg.mxu0
    %v1420 = vld [vmem:[#allocation2] sm:$0xfc]
    %v1421 = vld [vmem:[#allocation2 + $0x8] sm:$0xfc]
    %v1422 = vld [vmem:[#allocation2 + $0x10] sm:$0x3]
    %v1423 = vld [vmem:[#allocation2 + $0x18] sm:$0x3]
    %s1424 = scalar_lea.vmem %s2, 576
    %v1425 = vld [vmem:[%s1424] sm:$0xff]
    %v1426 = vld [vmem:[%s1424 + $0x8] sm:$0xff]
    %v1427 = vld [vmem:[%s1424 + $0x10] sm:$0xff]
    %v1428 = vld [vmem:[%s1424 + $0x18] sm:$0xff]
    %v1429 = vld [vmem:[%s1424 + $0x20] sm:$0xff]
    %v1430 = vld [vmem:[%s1424 + $0x28] sm:$0xff]
    %v1431 = vld [vmem:[%s1424 + $0x30] sm:$0xff]
    %v1432 = vld [vmem:[%s1424 + $0x38] sm:$0xff]
    %v1433 = vld [vmem:[%s1424 + $0x40] sm:$0xff]
    %v1434 = vld [vmem:[%s1424 + $0x48] sm:$0xff]
    %v1435 = vld [vmem:[%s1424 + $0x50] sm:$0xff]
    %v1436 = vld [vmem:[%s1424 + $0x58] sm:$0xff]
    %v1437 = vld [vmem:[%s1424 + $0x60] sm:$0xff]
    %v1438 = vld [vmem:[%s1424 + $0x68] sm:$0xff]
    %v1439 = vld [vmem:[%s1424 + $0x70] sm:$0xff]
    %v1440 = vld [vmem:[%s1424 + $0x78] sm:$0xff]
    %v1441 = vld [vmem:[%s1424 + $0x80] sm:$0xff]
    %v1442 = vld [vmem:[%s1424 + $0x88] sm:$0xff]
    %v1443 = vld [vmem:[%s1424 + $0x90] sm:$0xff]
    %v1444 = vld [vmem:[%s1424 + $0x98] sm:$0xff]
    %v1445 = vld [vmem:[%s1424 + $0xa0] sm:$0xff]
    %v1446 = vld [vmem:[%s1424 + $0xa8] sm:$0xff]
    %v1447 = vld [vmem:[%s1424 + $0xb0] sm:$0xff]
    %v1448 = vld [vmem:[%s1424 + $0xb8] sm:$0xff]
    %v1449 = vld [vmem:[%s1424 + $0xc0] sm:$0xff]
    %v1450 = vld [vmem:[%s1424 + $0xc8] sm:$0xff]
    %v1451 = vld [vmem:[%s1424 + $0xd0] sm:$0xff]
    %v1452 = vld [vmem:[%s1424 + $0xd8] sm:$0xff]
    %v1453 = vld [vmem:[%s1424 + $0xe0] sm:$0xff]
    %v1454 = vld [vmem:[%s1424 + $0xe8] sm:$0xff]
    %v1455 = vld [vmem:[%s1424 + $0xf0] sm:$0xff]
    %v1456 = vld [vmem:[%s1424 + $0xf8] sm:$0xff]
    %v1457 = vld [vmem:[%s1424 + $0x100] sm:$0xff]
    %v1458 = vld [vmem:[%s1424 + $0x108] sm:$0xff]
    %v1459 = vld [vmem:[%s1424 + $0x110] sm:$0xff]
    %v1460 = vld [vmem:[%s1424 + $0x118] sm:$0xff]
    %v1461 = vld [vmem:[#allocation2] sm:$0xf8]
    %v1462 = vld [vmem:[#allocation2 + $0x8] sm:$0xf8]
    %v1463 = vld [vmem:[#allocation2 + $0x10] sm:$0x7]
    %v1464 = vld [vmem:[#allocation2 + $0x18] sm:$0x7]
    %s1465 = scalar_lea.vmem %s2, 864
    %v1466 = vld [vmem:[%s1465] sm:$0xff]
    %v1467 = vld [vmem:[%s1465 + $0x8] sm:$0xff]
    %v1468 = vld [vmem:[%s1465 + $0x10] sm:$0xff]
    %v1469 = vld [vmem:[%s1465 + $0x18] sm:$0xff]
    %v1470 = vld [vmem:[%s1465 + $0x20] sm:$0xff]
    %v1471 = vld [vmem:[%s1465 + $0x28] sm:$0xff]
    %v1472 = vld [vmem:[%s1465 + $0x30] sm:$0xff]
    %v1473 = vld [vmem:[%s1465 + $0x38] sm:$0xff]
    %v1474 = vld [vmem:[%s1465 + $0x40] sm:$0xff]
    %v1475 = vld [vmem:[%s1465 + $0x48] sm:$0xff]
    %v1476 = vld [vmem:[%s1465 + $0x50] sm:$0xff]
    %v1477 = vld [vmem:[%s1465 + $0x58] sm:$0xff]
    %v1478 = vld [vmem:[%s1465 + $0x60] sm:$0xff]
    %v1479 = vld [vmem:[%s1465 + $0x68] sm:$0xff]
    %v1480 = vld [vmem:[%s1465 + $0x70] sm:$0xff]
    %v1481 = vld [vmem:[%s1465 + $0x78] sm:$0xff]
    %v1482 = vld [vmem:[%s1465 + $0x80] sm:$0xff]
    %v1483 = vld [vmem:[%s1465 + $0x88] sm:$0xff]
    %v1484 = vld [vmem:[%s1465 + $0x90] sm:$0xff]
    %v1485 = vld [vmem:[%s1465 + $0x98] sm:$0xff]
    %v1486 = vld [vmem:[%s1465 + $0xa0] sm:$0xff]
    %v1487 = vld [vmem:[%s1465 + $0xa8] sm:$0xff]
    %v1488 = vld [vmem:[%s1465 + $0xb0] sm:$0xff]
    %v1489 = vld [vmem:[%s1465 + $0xb8] sm:$0xff]
    %v1490 = vld [vmem:[%s1465 + $0xc0] sm:$0xff]
    %v1491 = vld [vmem:[%s1465 + $0xc8] sm:$0xff]
    %v1492 = vld [vmem:[%s1465 + $0xd0] sm:$0xff]
    %v1493 = vld [vmem:[%s1465 + $0xd8] sm:$0xff]
    %v1494 = vld [vmem:[%s1465 + $0xe0] sm:$0xff]
    %v1495 = vld [vmem:[%s1465 + $0xe8] sm:$0xff]
    %v1496 = vld [vmem:[%s1465 + $0xf0] sm:$0xff]
    %v1497 = vld [vmem:[%s1465 + $0xf8] sm:$0xff]
    %v1498 = vld [vmem:[%s1465 + $0x100] sm:$0xff]
    %v1499 = vld [vmem:[%s1465 + $0x108] sm:$0xff]
    %v1500 = vld [vmem:[%s1465 + $0x110] sm:$0xff]
    %v1501 = vld [vmem:[%s1465 + $0x118] sm:$0xff]
    %vm1506 = vcmask 1044480
    %v1507 = vrot.slane %v1461, 3
    %v1508 = vrot.slane %v1463, 3
    %v1509 = vsel %vm1506, %v1507, %v1508
    %v1510 = vrot.slane %v1462, 3
    %v1511 = vrot.slane %v1464, 3
    %v1512 = vsel %vm1506, %v1510, %v1511
    %v1514 = vsel %vm1242, %v1512, 0
    %1516 = vmatpush.msra.mxu0 %v1496
    %1517 = vmatpush.msra.mxu0 %v1494
    %1518 = vmatpush.msra.mxu0 %v1492
    %1519 = vmatpush.msra.mxu0 %v1490
    %1520 = vmatpush.msra.mxu0 %v1488
    %1521 = vmatpush.msra.mxu0 %v1486
    %1522 = vmatpush.msra.mxu0 %v1484
    %1523 = vmatpush.msra.mxu0 %v1482
    %1524 = vmatpush.msra.mxu0 %v1480
    %1525 = vmatpush.msra.mxu0 %v1478
    %1526 = vmatpush.msra.mxu0 %v1476
    %1527 = vmatpush.msra.mxu0 %v1474
    %1528 = vmatpush.msra.mxu0 %v1472
    %1529 = vmatpush.msra.mxu0 %v1470
    %1530 = vmatpush.msra.mxu0 %v1468
    %1531 = vmatpush.msra.mxu0 %v1466
    %1532 = vmatmul.f32.gmra.mxu0 %v1509
    %v1533 = vpop.f32.mrf.mxu0
    %v1534 = vadd.f32 0.0, %v1533
    %1535 = vdwg.mxu0
    %1536 = vmatpush.msra.mxu0 0.0
    %1537 = vmatpush.msra.mxu0 0.0
    %1538 = vmatpush.msra.mxu0 0.0
    %1539 = vmatpush.msra.mxu0 0.0
    %1540 = vmatpush.msra.mxu0 0.0
    %1541 = vmatpush.msra.mxu0 0.0
    %1542 = vmatpush.msra.mxu0 0.0
    %1543 = vmatpush.msra.mxu0 0.0
    %1544 = vmatpush.msra.mxu0 0.0
    %1545 = vmatpush.msra.mxu0 0.0
    %1546 = vmatpush.msra.mxu0 0.0
    %1547 = vmatpush.msra.mxu0 0.0
    %1548 = vmatpush.msra.mxu0 0.0
    %1549 = vmatpush.msra.mxu0 0.0
    %1550 = vmatpush.msra.mxu0 %v1500
    %1551 = vmatpush.msra.mxu0 %v1498
    %1552 = vmatmul.f32.gmra.mxu0 %v1514
    %v1553 = vpop.f32.mrf.mxu0
    %v1554 = vadd.f32 %v1534, %v1553
    %1555 = vdwg.mxu0
    %1556 = vmatpush.msra.mxu0 %v1497
    %1557 = vmatpush.msra.mxu0 %v1495
    %1558 = vmatpush.msra.mxu0 %v1493
    %1559 = vmatpush.msra.mxu0 %v1491
    %1560 = vmatpush.msra.mxu0 %v1489
    %1561 = vmatpush.msra.mxu0 %v1487
    %1562 = vmatpush.msra.mxu0 %v1485
    %1563 = vmatpush.msra.mxu0 %v1483
    %1564 = vmatpush.msra.mxu0 %v1481
    %1565 = vmatpush.msra.mxu0 %v1479
    %1566 = vmatpush.msra.mxu0 %v1477
    %1567 = vmatpush.msra.mxu0 %v1475
    %1568 = vmatpush.msra.mxu0 %v1473
    %1569 = vmatpush.msra.mxu0 %v1471
    %1570 = vmatpush.msra.mxu0 %v1469
    %1571 = vmatpush.msra.mxu0 %v1467
    %1572 = vmatmul.f32.gmra.mxu0 %v1509
    %v1573 = vpop.f32.mrf.mxu0
    %v1574 = vadd.f32 0.0, %v1573
    %1575 = vdwg.mxu0
    %1576 = vmatpush.msra.mxu0 0.0
    %1577 = vmatpush.msra.mxu0 0.0
    %1578 = vmatpush.msra.mxu0 0.0
    %1579 = vmatpush.msra.mxu0 0.0
    %1580 = vmatpush.msra.mxu0 0.0
    %1581 = vmatpush.msra.mxu0 0.0
    %1582 = vmatpush.msra.mxu0 0.0
    %1583 = vmatpush.msra.mxu0 0.0
    %1584 = vmatpush.msra.mxu0 0.0
    %1585 = vmatpush.msra.mxu0 0.0
    %1586 = vmatpush.msra.mxu0 0.0
    %1587 = vmatpush.msra.mxu0 0.0
    %1588 = vmatpush.msra.mxu0 0.0
    %1589 = vmatpush.msra.mxu0 0.0
    %1590 = vmatpush.msra.mxu0 %v1501
    %1591 = vmatpush.msra.mxu0 %v1499
    %1592 = vmatmul.f32.gmra.mxu0 %v1514
    %v1593 = vpop.f32.mrf.mxu0
    %v1594 = vadd.f32 %v1574, %v1593
    %1595 = vdwg.mxu0
    %v1596 = vld [vmem:[#allocation2] sm:$0xf0]
    %v1597 = vld [vmem:[#allocation2 + $0x8] sm:$0xf0]
    %v1598 = vld [vmem:[#allocation2 + $0x10] sm:$0xf]
    %v1599 = vld [vmem:[#allocation2 + $0x18] sm:$0xf]
    %s1600 = scalar_lea.vmem %s2, 1152
    %v1601 = vld [vmem:[%s1600] sm:$0xff]
    %v1602 = vld [vmem:[%s1600 + $0x8] sm:$0xff]
    %v1603 = vld [vmem:[%s1600 + $0x10] sm:$0xff]
    %v1604 = vld [vmem:[%s1600 + $0x18] sm:$0xff]
    %v1605 = vld [vmem:[%s1600 + $0x20] sm:$0xff]
    %v1606 = vld [vmem:[%s1600 + $0x28] sm:$0xff]
    %v1607 = vld [vmem:[%s1600 + $0x30] sm:$0xff]
    %v1608 = vld [vmem:[%s1600 + $0x38] sm:$0xff]
    %v1609 = vld [vmem:[%s1600 + $0x40] sm:$0xff]
    %v1610 = vld [vmem:[%s1600 + $0x48] sm:$0xff]
    %v1611 = vld [vmem:[%s1600 + $0x50] sm:$0xff]
    %v1612 = vld [vmem:[%s1600 + $0x58] sm:$0xff]
    %v1613 = vld [vmem:[%s1600 + $0x60] sm:$0xff]
    %v1614 = vld [vmem:[%s1600 + $0x68] sm:$0xff]
    %v1615 = vld [vmem:[%s1600 + $0x70] sm:$0xff]
    %v1616 = vld [vmem:[%s1600 + $0x78] sm:$0xff]
    %v1617 = vld [vmem:[%s1600 + $0x80] sm:$0xff]
    %v1618 = vld [vmem:[%s1600 + $0x88] sm:$0xff]
    %v1619 = vld [vmem:[%s1600 + $0x90] sm:$0xff]
    %v1620 = vld [vmem:[%s1600 + $0x98] sm:$0xff]
    %v1621 = vld [vmem:[%s1600 + $0xa0] sm:$0xff]
    %v1622 = vld [vmem:[%s1600 + $0xa8] sm:$0xff]
    %v1623 = vld [vmem:[%s1600 + $0xb0] sm:$0xff]
    %v1624 = vld [vmem:[%s1600 + $0xb8] sm:$0xff]
    %v1625 = vld [vmem:[%s1600 + $0xc0] sm:$0xff]
    %v1626 = vld [vmem:[%s1600 + $0xc8] sm:$0xff]
    %v1627 = vld [vmem:[%s1600 + $0xd0] sm:$0xff]
    %v1628 = vld [vmem:[%s1600 + $0xd8] sm:$0xff]
    %v1629 = vld [vmem:[%s1600 + $0xe0] sm:$0xff]
    %v1630 = vld [vmem:[%s1600 + $0xe8] sm:$0xff]
    %v1631 = vld [vmem:[%s1600 + $0xf0] sm:$0xff]
    %v1632 = vld [vmem:[%s1600 + $0xf8] sm:$0xff]
    %v1633 = vld [vmem:[%s1600 + $0x100] sm:$0xff]
    %v1634 = vld [vmem:[%s1600 + $0x108] sm:$0xff]
    %v1635 = vld [vmem:[%s1600 + $0x110] sm:$0xff]
    %v1636 = vld [vmem:[%s1600 + $0x118] sm:$0xff]
    %vm1641 = vcmask 1043456
    %v1642 = vrot.slane %v1596, 4
    %v1643 = vrot.slane %v1598, 4
    %v1644 = vsel %vm1641, %v1642, %v1643
    %v1645 = vrot.slane %v1597, 4
    %v1646 = vrot.slane %v1599, 4
    %v1647 = vsel %vm1641, %v1645, %v1646
    %v1649 = vsel %vm1242, %v1647, 0
    %1651 = vmatpush.msra.mxu0 %v1631
    %1652 = vmatpush.msra.mxu0 %v1629
    %1653 = vmatpush.msra.mxu0 %v1627
    %1654 = vmatpush.msra.mxu0 %v1625
    %1655 = vmatpush.msra.mxu0 %v1623
    %1656 = vmatpush.msra.mxu0 %v1621
    %1657 = vmatpush.msra.mxu0 %v1619
    %1658 = vmatpush.msra.mxu0 %v1617
    %1659 = vmatpush.msra.mxu0 %v1615
    %1660 = vmatpush.msra.mxu0 %v1613
    %1661 = vmatpush.msra.mxu0 %v1611
    %1662 = vmatpush.msra.mxu0 %v1609
    %1663 = vmatpush.msra.mxu0 %v1607
    %1664 = vmatpush.msra.mxu0 %v1605
    %1665 = vmatpush.msra.mxu0 %v1603
    %1666 = vmatpush.msra.mxu0 %v1601
    %1667 = vmatmul.f32.gmra.mxu0 %v1644
    %v1668 = vpop.f32.mrf.mxu0
    %v1669 = vadd.f32 0.0, %v1668
    %1670 = vdwg.mxu0
    %1671 = vmatpush.msra.mxu0 0.0
    %1672 = vmatpush.msra.mxu0 0.0
    %1673 = vmatpush.msra.mxu0 0.0
    %1674 = vmatpush.msra.mxu0 0.0
    %1675 = vmatpush.msra.mxu0 0.0
    %1676 = vmatpush.msra.mxu0 0.0
    %1677 = vmatpush.msra.mxu0 0.0
    %1678 = vmatpush.msra.mxu0 0.0
    %1679 = vmatpush.msra.mxu0 0.0
    %1680 = vmatpush.msra.mxu0 0.0
    %1681 = vmatpush.msra.mxu0 0.0
    %1682 = vmatpush.msra.mxu0 0.0
    %1683 = vmatpush.msra.mxu0 0.0
    %1684 = vmatpush.msra.mxu0 0.0
    %1685 = vmatpush.msra.mxu0 %v1635
    %1686 = vmatpush.msra.mxu0 %v1633
    %1687 = vmatmul.f32.gmra.mxu0 %v1649
    %v1688 = vpop.f32.mrf.mxu0
    %v1689 = vadd.f32 %v1669, %v1688
    %1690 = vdwg.mxu0
    %1691 = vmatpush.msra.mxu0 %v1632
    %1692 = vmatpush.msra.mxu0 %v1630
    %1693 = vmatpush.msra.mxu0 %v1628
    %1694 = vmatpush.msra.mxu0 %v1626
    %1695 = vmatpush.msra.mxu0 %v1624
    %1696 = vmatpush.msra.mxu0 %v1622
    %1697 = vmatpush.msra.mxu0 %v1620
    %1698 = vmatpush.msra.mxu0 %v1618
    %1699 = vmatpush.msra.mxu0 %v1616
    %1700 = vmatpush.msra.mxu0 %v1614
    %1701 = vmatpush.msra.mxu0 %v1612
    %1702 = vmatpush.msra.mxu0 %v1610
    %1703 = vmatpush.msra.mxu0 %v1608
    %1704 = vmatpush.msra.mxu0 %v1606
    %1705 = vmatpush.msra.mxu0 %v1604
    %1706 = vmatpush.msra.mxu0 %v1602
    %1707 = vmatmul.f32.gmra.mxu0 %v1644
    %v1708 = vpop.f32.mrf.mxu0
    %v1709 = vadd.f32 0.0, %v1708
    %1710 = vdwg.mxu0
    %1711 = vmatpush.msra.mxu0 0.0
    %1712 = vmatpush.msra.mxu0 0.0
    %1713 = vmatpush.msra.mxu0 0.0
    %1714 = vmatpush.msra.mxu0 0.0
    %1715 = vmatpush.msra.mxu0 0.0
    %1716 = vmatpush.msra.mxu0 0.0
    %1717 = vmatpush.msra.mxu0 0.0
    %1718 = vmatpush.msra.mxu0 0.0
    %1719 = vmatpush.msra.mxu0 0.0
    %1720 = vmatpush.msra.mxu0 0.0
    %1721 = vmatpush.msra.mxu0 0.0
    %1722 = vmatpush.msra.mxu0 0.0
    %1723 = vmatpush.msra.mxu0 0.0
    %1724 = vmatpush.msra.mxu0 0.0
    %1725 = vmatpush.msra.mxu0 %v1636
    %1726 = vmatpush.msra.mxu0 %v1634
    %1727 = vmatmul.f32.gmra.mxu0 %v1649
    %v1728 = vpop.f32.mrf.mxu0
    %v1729 = vadd.f32 %v1709, %v1728
    %1730 = vdwg.mxu0
    %v1732 = vsel %vm1242, %v1248, 0
    %1734 = vmatpush.msra.mxu0 %v1279
    %1735 = vmatpush.msra.mxu0 %v1277
    %1736 = vmatpush.msra.mxu0 %v1275
    %1737 = vmatpush.msra.mxu0 %v1273
    %1738 = vmatpush.msra.mxu0 %v1271
    %1739 = vmatpush.msra.mxu0 %v1269
    %1740 = vmatpush.msra.mxu0 %v1267
    %1741 = vmatpush.msra.mxu0 %v1265
    %1742 = vmatpush.msra.mxu0 %v1263
    %1743 = vmatpush.msra.mxu0 %v1261
    %1744 = vmatpush.msra.mxu0 %v1259
    %1745 = vmatpush.msra.mxu0 %v1257
    %1746 = vmatpush.msra.mxu0 %v1255
    %1747 = vmatpush.msra.mxu0 %v1253
    %1748 = vmatpush.msra.mxu0 %v1251
    %1749 = vmatpush.msra.mxu0 %v1249
    %1750 = vmatmul.f32.gmra.mxu0 %v1247
    %v1751 = vpop.f32.mrf.mxu0
    %v1752 = vadd.f32 %v1378, %v1751
    %1753 = vdwg.mxu0
    %1754 = vmatpush.msra.mxu0 0.0
    %1755 = vmatpush.msra.mxu0 0.0
    %1756 = vmatpush.msra.mxu0 0.0
    %1757 = vmatpush.msra.mxu0 0.0
    %1758 = vmatpush.msra.mxu0 0.0
    %1759 = vmatpush.msra.mxu0 0.0
    %1760 = vmatpush.msra.mxu0 0.0
    %1761 = vmatpush.msra.mxu0 0.0
    %1762 = vmatpush.msra.mxu0 0.0
    %1763 = vmatpush.msra.mxu0 0.0
    %1764 = vmatpush.msra.mxu0 0.0
    %1765 = vmatpush.msra.mxu0 0.0
    %1766 = vmatpush.msra.mxu0 0.0
    %1767 = vmatpush.msra.mxu0 0.0
    %1768 = vmatpush.msra.mxu0 %v1283
    %1769 = vmatpush.msra.mxu0 %v1281
    %1770 = vmatmul.f32.gmra.mxu0 %v1732
    %v1771 = vpop.f32.mrf.mxu0
    %v1772 = vadd.f32 %v1752, %v1771
    %1773 = vdwg.mxu0
    %1774 = vmatpush.msra.mxu0 %v1280
    %1775 = vmatpush.msra.mxu0 %v1278
    %1776 = vmatpush.msra.mxu0 %v1276
    %1777 = vmatpush.msra.mxu0 %v1274
    %1778 = vmatpush.msra.mxu0 %v1272
    %1779 = vmatpush.msra.mxu0 %v1270
    %1780 = vmatpush.msra.mxu0 %v1268
    %1781 = vmatpush.msra.mxu0 %v1266
    %1782 = vmatpush.msra.mxu0 %v1264
    %1783 = vmatpush.msra.mxu0 %v1262
    %1784 = vmatpush.msra.mxu0 %v1260
    %1785 = vmatpush.msra.mxu0 %v1258
    %1786 = vmatpush.msra.mxu0 %v1256
    %1787 = vmatpush.msra.mxu0 %v1254
    %1788 = vmatpush.msra.mxu0 %v1252
    %1789 = vmatpush.msra.mxu0 %v1250
    %1790 = vmatmul.f32.gmra.mxu0 %v1247
    %v1791 = vpop.f32.mrf.mxu0
    %v1792 = vadd.f32 %v1418, %v1791
    %1793 = vdwg.mxu0
    %1794 = vmatpush.msra.mxu0 0.0
    %1795 = vmatpush.msra.mxu0 0.0
    %1796 = vmatpush.msra.mxu0 0.0
    %1797 = vmatpush.msra.mxu0 0.0
    %1798 = vmatpush.msra.mxu0 0.0
    %1799 = vmatpush.msra.mxu0 0.0
    %1800 = vmatpush.msra.mxu0 0.0
    %1801 = vmatpush.msra.mxu0 0.0
    %1802 = vmatpush.msra.mxu0 0.0
    %1803 = vmatpush.msra.mxu0 0.0
    %1804 = vmatpush.msra.mxu0 0.0
    %1805 = vmatpush.msra.mxu0 0.0
    %1806 = vmatpush.msra.mxu0 0.0
    %1807 = vmatpush.msra.mxu0 0.0
    %1808 = vmatpush.msra.mxu0 %v1284
    %1809 = vmatpush.msra.mxu0 %v1282
    %1810 = vmatmul.f32.gmra.mxu0 %v1732
    %v1811 = vpop.f32.mrf.mxu0
    %v1812 = vadd.f32 %v1792, %v1811
    %1813 = vdwg.mxu0
    %vm1818 = vcmask 1045504
    %v1819 = vrot.slane %v1420, 2
    %v1820 = vrot.slane %v1422, 2
    %v1821 = vsel %vm1818, %v1819, %v1820
    %v1822 = vrot.slane %v1421, 2
    %v1823 = vrot.slane %v1423, 2
    %v1824 = vsel %vm1818, %v1822, %v1823
    %v1826 = vsel %vm1242, %v1824, 0
    %1828 = vmatpush.msra.mxu0 %v1455
    %1829 = vmatpush.msra.mxu0 %v1453
    %1830 = vmatpush.msra.mxu0 %v1451
    %1831 = vmatpush.msra.mxu0 %v1449
    %1832 = vmatpush.msra.mxu0 %v1447
    %1833 = vmatpush.msra.mxu0 %v1445
    %1834 = vmatpush.msra.mxu0 %v1443
    %1835 = vmatpush.msra.mxu0 %v1441
    %1836 = vmatpush.msra.mxu0 %v1439
    %1837 = vmatpush.msra.mxu0 %v1437
    %1838 = vmatpush.msra.mxu0 %v1435
    %1839 = vmatpush.msra.mxu0 %v1433
    %1840 = vmatpush.msra.mxu0 %v1431
    %1841 = vmatpush.msra.mxu0 %v1429
    %1842 = vmatpush.msra.mxu0 %v1427
    %1843 = vmatpush.msra.mxu0 %v1425
    %1844 = vmatmul.f32.gmra.mxu0 %v1821
    %v1845 = vpop.f32.mrf.mxu0
    %v1846 = vadd.f32 %v1554, %v1845
    %1847 = vdwg.mxu0
    %1848 = vmatpush.msra.mxu0 0.0
    %1849 = vmatpush.msra.mxu0 0.0
    %1850 = vmatpush.msra.mxu0 0.0
    %1851 = vmatpush.msra.mxu0 0.0
    %1852 = vmatpush.msra.mxu0 0.0
    %1853 = vmatpush.msra.mxu0 0.0
    %1854 = vmatpush.msra.mxu0 0.0
    %1855 = vmatpush.msra.mxu0 0.0
    %1856 = vmatpush.msra.mxu0 0.0
    %1857 = vmatpush.msra.mxu0 0.0
    %1858 = vmatpush.msra.mxu0 0.0
    %1859 = vmatpush.msra.mxu0 0.0
    %1860 = vmatpush.msra.mxu0 0.0
    %1861 = vmatpush.msra.mxu0 0.0
    %1862 = vmatpush.msra.mxu0 %v1459
    %1863 = vmatpush.msra.mxu0 %v1457
    %1864 = vmatmul.f32.gmra.mxu0 %v1826
    %v1865 = vpop.f32.mrf.mxu0
    %v1866 = vadd.f32 %v1846, %v1865
    %1867 = vdwg.mxu0
    %1868 = vmatpush.msra.mxu0 %v1456
    %1869 = vmatpush.msra.mxu0 %v1454
    %1870 = vmatpush.msra.mxu0 %v1452
    %1871 = vmatpush.msra.mxu0 %v1450
    %1872 = vmatpush.msra.mxu0 %v1448
    %1873 = vmatpush.msra.mxu0 %v1446
    %1874 = vmatpush.msra.mxu0 %v1444
    %1875 = vmatpush.msra.mxu0 %v1442
    %1876 = vmatpush.msra.mxu0 %v1440
    %1877 = vmatpush.msra.mxu0 %v1438
    %1878 = vmatpush.msra.mxu0 %v1436
    %1879 = vmatpush.msra.mxu0 %v1434
    %1880 = vmatpush.msra.mxu0 %v1432
    %1881 = vmatpush.msra.mxu0 %v1430
    %1882 = vmatpush.msra.mxu0 %v1428
    %1883 = vmatpush.msra.mxu0 %v1426
    %1884 = vmatmul.f32.gmra.mxu0 %v1821
    %v1885 = vpop.f32.mrf.mxu0
    %v1886 = vadd.f32 %v1594, %v1885
    %1887 = vdwg.mxu0
    %1888 = vmatpush.msra.mxu0 0.0
    %1889 = vmatpush.msra.mxu0 0.0
    %1890 = vmatpush.msra.mxu0 0.0
    %1891 = vmatpush.msra.mxu0 0.0
    %1892 = vmatpush.msra.mxu0 0.0
    %1893 = vmatpush.msra.mxu0 0.0
    %1894 = vmatpush.msra.mxu0 0.0
    %1895 = vmatpush.msra.mxu0 0.0
    %1896 = vmatpush.msra.mxu0 0.0
    %1897 = vmatpush.msra.mxu0 0.0
    %1898 = vmatpush.msra.mxu0 0.0
    %1899 = vmatpush.msra.mxu0 0.0
    %1900 = vmatpush.msra.mxu0 0.0
    %1901 = vmatpush.msra.mxu0 0.0
    %1902 = vmatpush.msra.mxu0 %v1460
    %1903 = vmatpush.msra.mxu0 %v1458
    %1904 = vmatmul.f32.gmra.mxu0 %v1826
    %v1905 = vpop.f32.mrf.mxu0
    %v1906 = vadd.f32 %v1886, %v1905
    %1907 = vdwg.mxu0
    %v1908 = vadd.f32 %v1772, %v1866
    %v1909 = vadd.f32 %v1812, %v1906
    %v1910 = vadd.f32 %v1908, %v1689
    %v1911 = vadd.f32 %v1909, %v1729
    %v1912 = vld [vmem:[%s5] sm:$0xf]
    %vm1913 = vcmask 64512
    %v1915 = vsel %vm1913, %v1912, 0
    %1917 = vmatpush.msra.mxu0 0.0
    %1918 = vmatpush.msra.mxu0 0.0
    %1919 = vmatpush.msra.mxu0 0.0
    %1920 = vmatpush.msra.mxu0 0.0
    %1921 = vmatpush.msra.mxu0 0.0
    %1922 = vmatpush.msra.mxu0 0.0
    %1923 = vmatpush.msra.mxu0 0.0
    %1924 = vmatpush.msra.mxu0 0.0
    %1925 = vmatpush.msra.mxu0 0.0
    %1926 = vmatpush.msra.mxu0 0.0
    %1927 = vmatpush.msra.mxu0 0.0
    %1928 = vmatpush.msra.mxu0 0.0
    %1929 = vmatpush.msra.mxu0 0.0
    %1930 = vmatpush.msra.mxu0 0.0
    %1931 = vmatpush.msra.mxu0 0.0
    %1932 = vmatpush.msra.mxu0 %v1910
    %1933 = vmatmul.f32.gmra.mxu0 %v1915
    %v1934 = vpop.f32.mrf.mxu0
    %v1935 = vadd.f32 0.0, %v1934
    %1936 = vdwg.mxu0
    %1937 = vmatpush.msra.mxu0 0.0
    %1938 = vmatpush.msra.mxu0 0.0
    %1939 = vmatpush.msra.mxu0 0.0
    %1940 = vmatpush.msra.mxu0 0.0
    %1941 = vmatpush.msra.mxu0 0.0
    %1942 = vmatpush.msra.mxu0 0.0
    %1943 = vmatpush.msra.mxu0 0.0
    %1944 = vmatpush.msra.mxu0 0.0
    %1945 = vmatpush.msra.mxu0 0.0
    %1946 = vmatpush.msra.mxu0 0.0
    %1947 = vmatpush.msra.mxu0 0.0
    %1948 = vmatpush.msra.mxu0 0.0
    %1949 = vmatpush.msra.mxu0 0.0
    %1950 = vmatpush.msra.mxu0 0.0
    %1951 = vmatpush.msra.mxu0 0.0
    %1952 = vmatpush.msra.mxu0 %v1911
    %1953 = vmatmul.f32.gmra.mxu0 %v1915
    %v1954 = vpop.f32.mrf.mxu0
    %v1955 = vadd.f32 0.0, %v1954
    %1956 = vdwg.mxu0
    %s1957 = scalar_lea.vmem %s5, 4
    %v1958 = vld [vmem:[%s1957] sm:$0xf]
    %v1960 = vsel %vm1913, %v1958, 0
    %1962 = vmatpush.msra.mxu0 0.0
    %1963 = vmatpush.msra.mxu0 0.0
    %1964 = vmatpush.msra.mxu0 0.0
    %1965 = vmatpush.msra.mxu0 0.0
    %1966 = vmatpush.msra.mxu0 0.0
    %1967 = vmatpush.msra.mxu0 0.0
    %1968 = vmatpush.msra.mxu0 0.0
    %1969 = vmatpush.msra.mxu0 0.0
    %1970 = vmatpush.msra.mxu0 0.0
    %1971 = vmatpush.msra.mxu0 0.0
    %1972 = vmatpush.msra.mxu0 0.0
    %1973 = vmatpush.msra.mxu0 0.0
    %1974 = vmatpush.msra.mxu0 0.0
    %1975 = vmatpush.msra.mxu0 0.0
    %1976 = vmatpush.msra.mxu0 0.0
    %1977 = vmatpush.msra.mxu0 %v1910
    %1978 = vmatmul.f32.gmra.mxu0 %v1960
    %v1979 = vpop.f32.mrf.mxu0
    %v1980 = vadd.f32 0.0, %v1979
    %1981 = vdwg.mxu0
    %1982 = vmatpush.msra.mxu0 0.0
    %1983 = vmatpush.msra.mxu0 0.0
    %1984 = vmatpush.msra.mxu0 0.0
    %1985 = vmatpush.msra.mxu0 0.0
    %1986 = vmatpush.msra.mxu0 0.0
    %1987 = vmatpush.msra.mxu0 0.0
    %1988 = vmatpush.msra.mxu0 0.0
    %1989 = vmatpush.msra.mxu0 0.0
    %1990 = vmatpush.msra.mxu0 0.0
    %1991 = vmatpush.msra.mxu0 0.0
    %1992 = vmatpush.msra.mxu0 0.0
    %1993 = vmatpush.msra.mxu0 0.0
    %1994 = vmatpush.msra.mxu0 0.0
    %1995 = vmatpush.msra.mxu0 0.0
    %1996 = vmatpush.msra.mxu0 0.0
    %1997 = vmatpush.msra.mxu0 %v1911
    %1998 = vmatmul.f32.gmra.mxu0 %v1960
    %v1999 = vpop.f32.mrf.mxu0
    %v2000 = vadd.f32 0.0, %v1999
    %2001 = vdwg.mxu0
    %v2002 = vmax.f32 %v1935, %v1980
    %v2003 = vmax.f32 %v1955, %v2000
    %v2004 = vld [vmem:[#allocation3] sm:$0xff]
    %v2005 = vld [vmem:[#allocation3 + $0x8] sm:$0xff]
    %v2006 = vld [vmem:[#allocation3 + $0x10] sm:$0xff]
    %v2007 = vld [vmem:[#allocation3 + $0x18] sm:$0xff]
    %v2008 = vld [vmem:[#allocation3 + $0x20] sm:$0xff]
    %v2009 = vld [vmem:[#allocation3 + $0x28] sm:$0xff]
    %v2010 = vld [vmem:[#allocation3 + $0x30] sm:$0xff]
    %v2011 = vld [vmem:[#allocation3 + $0x38] sm:$0xff]
    %v2012 = vld [vmem:[#allocation3 + $0x40] sm:$0xff]
    %v2013 = vld [vmem:[#allocation3 + $0x48] sm:$0xff]
    %v2014 = vld [vmem:[#allocation3 + $0x50] sm:$0xff]
    %v2015 = vld [vmem:[#allocation3 + $0x58] sm:$0xff]
    %v2016 = vld [vmem:[#allocation3 + $0x60] sm:$0xff]
    %v2017 = vld [vmem:[#allocation3 + $0x68] sm:$0xff]
    %v2018 = vld [vmem:[#allocation3 + $0x70] sm:$0xff]
    %v2019 = vld [vmem:[#allocation3 + $0x78] sm:$0xff]
    %v2020 = vld [vmem:[#allocation3 + $0x80] sm:$0xff]
    %v2021 = vld [vmem:[#allocation3 + $0x88] sm:$0xff]
    %v2022 = vld [vmem:[#allocation3 + $0x90] sm:$0xff]
    %v2023 = vld [vmem:[#allocation3 + $0x98] sm:$0xff]
    %v2024 = vld [vmem:[#allocation3 + $0xa0] sm:$0xff]
    %v2025 = vld [vmem:[#allocation3 + $0xa8] sm:$0xff]
    %v2026 = vld [vmem:[#allocation3 + $0xb0] sm:$0xff]
    %v2027 = vld [vmem:[#allocation3 + $0xb8] sm:$0xff]
    %vm2028 = vcmask 523264
    %v2030 = vsel %vm2028, %v2003, 0
    %2032 = vmatpush.msra.mxu0 %v2019
    %2033 = vmatpush.msra.mxu0 %v2018
    %2034 = vmatpush.msra.mxu0 %v2017
    %2035 = vmatpush.msra.mxu0 %v2016
    %2036 = vmatpush.msra.mxu0 %v2015
    %2037 = vmatpush.msra.mxu0 %v2014
    %2038 = vmatpush.msra.mxu0 %v2013
    %2039 = vmatpush.msra.mxu0 %v2012
    %2040 = vmatpush.msra.mxu0 %v2011
    %2041 = vmatpush.msra.mxu0 %v2010
    %2042 = vmatpush.msra.mxu0 %v2009
    %2043 = vmatpush.msra.mxu0 %v2008
    %2044 = vmatpush.msra.mxu0 %v2007
    %2045 = vmatpush.msra.mxu0 %v2006
    %2046 = vmatpush.msra.mxu0 %v2005
    %2047 = vmatpush.msra.mxu0 %v2004
    %2048 = vmatmul.f32.gmra.mxu0 %v2002
    %v2049 = vpop.f32.mrf.mxu0
    %v2050 = vadd.f32 0.0, %v2049
    %2051 = vdwg.mxu0
    %2052 = vmatpush.msra.mxu0 0.0
    %2053 = vmatpush.msra.mxu0 0.0
    %2054 = vmatpush.msra.mxu0 0.0
    %2055 = vmatpush.msra.mxu0 0.0
    %2056 = vmatpush.msra.mxu0 0.0
    %2057 = vmatpush.msra.mxu0 0.0
    %2058 = vmatpush.msra.mxu0 0.0
    %2059 = vmatpush.msra.mxu0 0.0
    %2060 = vmatpush.msra.mxu0 %v2027
    %2061 = vmatpush.msra.mxu0 %v2026
    %2062 = vmatpush.msra.mxu0 %v2025
    %2063 = vmatpush.msra.mxu0 %v2024
    %2064 = vmatpush.msra.mxu0 %v2023
    %2065 = vmatpush.msra.mxu0 %v2022
    %2066 = vmatpush.msra.mxu0 %v2021
    %2067 = vmatpush.msra.mxu0 %v2020
    %2068 = vmatmul.f32.gmra.mxu0 %v2030
    %v2069 = vpop.f32.mrf.mxu0
    %v2070 = vadd.f32 %v2050, %v2069
    %2071 = vdwg.mxu0
    %s2072 = scalar_lea.vmem [#allocation3], 192
    %v2073 = vld [vmem:[%s2072] sm:$0xff]
    %v2074 = vld [vmem:[%s2072 + $0x8] sm:$0xff]
    %v2075 = vld [vmem:[%s2072 + $0x10] sm:$0xff]
    %v2076 = vld [vmem:[%s2072 + $0x18] sm:$0xff]
    %v2077 = vld [vmem:[%s2072 + $0x20] sm:$0xff]
    %v2078 = vld [vmem:[%s2072 + $0x28] sm:$0xff]
    %v2079 = vld [vmem:[%s2072 + $0x30] sm:$0xff]
    %v2080 = vld [vmem:[%s2072 + $0x38] sm:$0xff]
    %v2081 = vld [vmem:[%s2072 + $0x40] sm:$0xff]
    %v2082 = vld [vmem:[%s2072 + $0x48] sm:$0xff]
    %v2083 = vld [vmem:[%s2072 + $0x50] sm:$0xff]
    %v2084 = vld [vmem:[%s2072 + $0x58] sm:$0xff]
    %v2085 = vld [vmem:[%s2072 + $0x60] sm:$0xff]
    %v2086 = vld [vmem:[%s2072 + $0x68] sm:$0xff]
    %v2087 = vld [vmem:[%s2072 + $0x70] sm:$0xff]
    %v2088 = vld [vmem:[%s2072 + $0x78] sm:$0xff]
    %v2089 = vld [vmem:[%s2072 + $0x80] sm:$0xff]
    %v2090 = vld [vmem:[%s2072 + $0x88] sm:$0xff]
    %v2091 = vld [vmem:[%s2072 + $0x90] sm:$0xff]
    %v2092 = vld [vmem:[%s2072 + $0x98] sm:$0xff]
    %v2093 = vld [vmem:[%s2072 + $0xa0] sm:$0xff]
    %v2094 = vld [vmem:[%s2072 + $0xa8] sm:$0xff]
    %v2095 = vld [vmem:[%s2072 + $0xb0] sm:$0xff]
    %v2096 = vld [vmem:[%s2072 + $0xb8] sm:$0xff]
    %2097 = vmatpush.msra.mxu0 %v2088
    %2098 = vmatpush.msra.mxu0 %v2087
    %2099 = vmatpush.msra.mxu0 %v2086
    %2100 = vmatpush.msra.mxu0 %v2085
    %2101 = vmatpush.msra.mxu0 %v2084
    %2102 = vmatpush.msra.mxu0 %v2083
    %2103 = vmatpush.msra.mxu0 %v2082
    %2104 = vmatpush.msra.mxu0 %v2081
    %2105 = vmatpush.msra.mxu0 %v2080
    %2106 = vmatpush.msra.mxu0 %v2079
    %2107 = vmatpush.msra.mxu0 %v2078
    %2108 = vmatpush.msra.mxu0 %v2077
    %2109 = vmatpush.msra.mxu0 %v2076
    %2110 = vmatpush.msra.mxu0 %v2075
    %2111 = vmatpush.msra.mxu0 %v2074
    %2112 = vmatpush.msra.mxu0 %v2073
    %2113 = vmatmul.f32.gmra.mxu0 %v2002
    %v2114 = vpop.f32.mrf.mxu0
    %v2115 = vadd.f32 0.0, %v2114
    %2116 = vdwg.mxu0
    %2117 = vmatpush.msra.mxu0 0.0
    %2118 = vmatpush.msra.mxu0 0.0
    %2119 = vmatpush.msra.mxu0 0.0
    %2120 = vmatpush.msra.mxu0 0.0
    %2121 = vmatpush.msra.mxu0 0.0
    %2122 = vmatpush.msra.mxu0 0.0
    %2123 = vmatpush.msra.mxu0 0.0
    %2124 = vmatpush.msra.mxu0 0.0
    %2125 = vmatpush.msra.mxu0 %v2096
    %2126 = vmatpush.msra.mxu0 %v2095
    %2127 = vmatpush.msra.mxu0 %v2094
    %2128 = vmatpush.msra.mxu0 %v2093
    %2129 = vmatpush.msra.mxu0 %v2092
    %2130 = vmatpush.msra.mxu0 %v2091
    %2131 = vmatpush.msra.mxu0 %v2090
    %2132 = vmatpush.msra.mxu0 %v2089
    %2133 = vmatmul.f32.gmra.mxu0 %v2030
    %v2134 = vpop.f32.mrf.mxu0
    %v2135 = vadd.f32 %v2115, %v2134
    %2136 = vdwg.mxu0
    %v2137 = vmax.f32 %v2070, %v2135
    %v2138 = vld [vmem:[%s7 + $0x1] ss:$0 sm:$0xff]
    %v2139 = vadd.f32 %v2137, %v2138
    %v2140 = vmax.f32 %v2139, 0.0
    %v2141 = vld [vmem:[%s8] sm:$0xff]
    %v2142 = vld [vmem:[%s8 + $0x8] sm:$0xff]
    %v2143 = vld [vmem:[%s8 + $0x10] sm:$0xff]
    %v2144 = vld [vmem:[%s8 + $0x18] sm:$0xff]
    %v2145 = vld [vmem:[%s8 + $0x20] sm:$0xff]
    %v2146 = vld [vmem:[%s8 + $0x28] sm:$0xff]
    %v2147 = vld [vmem:[%s8 + $0x30] sm:$0xff]
    %v2148 = vld [vmem:[%s8 + $0x38] sm:$0xff]
    %v2149 = vld [vmem:[%s8 + $0x40] sm:$0xff]
    %v2150 = vld [vmem:[%s8 + $0x48] sm:$0xff]
    %v2151 = vld [vmem:[%s8 + $0x50] sm:$0xff]
    %v2152 = vld [vmem:[%s8 + $0x58] sm:$0xff]
    %v2153 = vld [vmem:[%s8 + $0x60] sm:$0xff]
    %v2154 = vld [vmem:[%s8 + $0x68] sm:$0xff]
    %v2155 = vld [vmem:[%s8 + $0x70] sm:$0xff]
    %v2156 = vld [vmem:[%s8 + $0x78] sm:$0xff]
    %v2157 = vld [vmem:[%s8 + $0x80] sm:$0xff]
    %v2158 = vld [vmem:[%s8 + $0x88] sm:$0xff]
    %v2159 = vld [vmem:[%s8 + $0x90] sm:$0xff]
    %v2160 = vld [vmem:[%s8 + $0x98] sm:$0xff]
    %v2161 = vld [vmem:[%s8 + $0xa0] sm:$0xff]
    %v2162 = vld [vmem:[%s8 + $0xa8] sm:$0xff]
    %v2163 = vld [vmem:[%s8 + $0xb0] sm:$0xff]
    %v2164 = vld [vmem:[%s8 + $0xb8] sm:$0xff]
    %v2166 = vrot.slane %v2140, 1
    %vm2167 = vcmask 785408
    %v2168 = vsel %vm2167, %v2166, 0
    %2170 = vmatpush.msra.mxu0 0.0
    %2171 = vmatpush.msra.mxu0 0.0
    %2172 = vmatpush.msra.mxu0 0.0
    %2173 = vmatpush.msra.mxu0 0.0
    %2174 = vmatpush.msra.mxu0 %v2164
    %2175 = vmatpush.msra.mxu0 %v2163
    %2176 = vmatpush.msra.mxu0 %v2162
    %2177 = vmatpush.msra.mxu0 %v2161
    %2178 = vmatpush.msra.mxu0 %v2160
    %2179 = vmatpush.msra.mxu0 %v2159
    %2180 = vmatpush.msra.mxu0 %v2158
    %2181 = vmatpush.msra.mxu0 %v2157
    %2182 = vmatpush.msra.mxu0 %v2156
    %2183 = vmatpush.msra.mxu0 %v2155
    %2184 = vmatpush.msra.mxu0 %v2154
    %2185 = vmatpush.msra.mxu0 %v2153
    %2186 = vmatmul.f32.gmra.mxu0 %v2168
    %v2187 = vpop.f32.mrf.mxu0
    %v2188 = vadd.f32 0.0, %v2187
    %2189 = vdwg.mxu0
    %v2190 = vld [vmem:[%s8 + $0xc0] sm:$0xff]
    %v2191 = vld [vmem:[%s8 + $0xc8] sm:$0xff]
    %v2192 = vld [vmem:[%s8 + $0xd0] sm:$0xff]
    %v2193 = vld [vmem:[%s8 + $0xd8] sm:$0xff]
    %v2194 = vld [vmem:[%s8 + $0xe0] sm:$0xff]
    %v2195 = vld [vmem:[%s8 + $0xe8] sm:$0xff]
    %v2196 = vld [vmem:[%s8 + $0xf0] sm:$0xff]
    %v2197 = vld [vmem:[%s8 + $0xf8] sm:$0xff]
    %v2198 = vld [vmem:[%s8 + $0x100] sm:$0xff]
    %v2199 = vld [vmem:[%s8 + $0x108] sm:$0xff]
    %v2200 = vld [vmem:[%s8 + $0x110] sm:$0xff]
    %v2201 = vld [vmem:[%s8 + $0x118] sm:$0xff]
    %v2202 = vld [vmem:[%s8 + $0x120] sm:$0xff]
    %v2203 = vld [vmem:[%s8 + $0x128] sm:$0xff]
    %v2204 = vld [vmem:[%s8 + $0x130] sm:$0xff]
    %v2205 = vld [vmem:[%s8 + $0x138] sm:$0xff]
    %v2206 = vld [vmem:[%s8 + $0x140] sm:$0xff]
    %v2207 = vld [vmem:[%s8 + $0x148] sm:$0xff]
    %v2208 = vld [vmem:[%s8 + $0x150] sm:$0xff]
    %v2209 = vld [vmem:[%s8 + $0x158] sm:$0xff]
    %v2210 = vld [vmem:[%s8 + $0x160] sm:$0xff]
    %v2211 = vld [vmem:[%s8 + $0x168] sm:$0xff]
    %v2212 = vld [vmem:[%s8 + $0x170] sm:$0xff]
    %v2213 = vld [vmem:[%s8 + $0x178] sm:$0xff]
    %v2214 = vrot.slane %v2140, 3
    %v2215 = vsel %vm2167, %v2214, 0
    %2217 = vmatpush.msra.mxu0 0.0
    %2218 = vmatpush.msra.mxu0 0.0
    %2219 = vmatpush.msra.mxu0 0.0
    %2220 = vmatpush.msra.mxu0 0.0
    %2221 = vmatpush.msra.mxu0 %v2213
    %2222 = vmatpush.msra.mxu0 %v2212
    %2223 = vmatpush.msra.mxu0 %v2211
    %2224 = vmatpush.msra.mxu0 %v2210
    %2225 = vmatpush.msra.mxu0 %v2209
    %2226 = vmatpush.msra.mxu0 %v2208
    %2227 = vmatpush.msra.mxu0 %v2207
    %2228 = vmatpush.msra.mxu0 %v2206
    %2229 = vmatpush.msra.mxu0 %v2205
    %2230 = vmatpush.msra.mxu0 %v2204
    %2231 = vmatpush.msra.mxu0 %v2203
    %2232 = vmatpush.msra.mxu0 %v2202
    %2233 = vmatmul.f32.gmra.mxu0 %v2215
    %v2234 = vpop.f32.mrf.mxu0
    %v2235 = vadd.f32 0.0, %v2234
    %2236 = vdwg.mxu0
    %v2237 = vsel %vm2167, %v2140, 0
    %2239 = vmatpush.msra.mxu0 0.0
    %2240 = vmatpush.msra.mxu0 0.0
    %2241 = vmatpush.msra.mxu0 0.0
    %2242 = vmatpush.msra.mxu0 0.0
    %2243 = vmatpush.msra.mxu0 %v2152
    %2244 = vmatpush.msra.mxu0 %v2151
    %2245 = vmatpush.msra.mxu0 %v2150
    %2246 = vmatpush.msra.mxu0 %v2149
    %2247 = vmatpush.msra.mxu0 %v2148
    %2248 = vmatpush.msra.mxu0 %v2147
    %2249 = vmatpush.msra.mxu0 %v2146
    %2250 = vmatpush.msra.mxu0 %v2145
    %2251 = vmatpush.msra.mxu0 %v2144
    %2252 = vmatpush.msra.mxu0 %v2143
    %2253 = vmatpush.msra.mxu0 %v2142
    %2254 = vmatpush.msra.mxu0 %v2141
    %2255 = vmatmul.f32.gmra.mxu0 %v2237
    %v2256 = vpop.f32.mrf.mxu0
    %v2257 = vadd.f32 %v2188, %v2256
    %2258 = vdwg.mxu0
    %v2259 = vrot.slane %v2140, 2
    %v2260 = vsel %vm2167, %v2259, 0
    %2262 = vmatpush.msra.mxu0 0.0
    %2263 = vmatpush.msra.mxu0 0.0
    %2264 = vmatpush.msra.mxu0 0.0
    %2265 = vmatpush.msra.mxu0 0.0
    %2266 = vmatpush.msra.mxu0 %v2201
    %2267 = vmatpush.msra.mxu0 %v2200
    %2268 = vmatpush.msra.mxu0 %v2199
    %2269 = vmatpush.msra.mxu0 %v2198
    %2270 = vmatpush.msra.mxu0 %v2197
    %2271 = vmatpush.msra.mxu0 %v2196
    %2272 = vmatpush.msra.mxu0 %v2195
    %2273 = vmatpush.msra.mxu0 %v2194
    %2274 = vmatpush.msra.mxu0 %v2193
    %2275 = vmatpush.msra.mxu0 %v2192
    %2276 = vmatpush.msra.mxu0 %v2191
    %2277 = vmatpush.msra.mxu0 %v2190
    %2278 = vmatmul.f32.gmra.mxu0 %v2260
    %v2279 = vpop.f32.mrf.mxu0
    %v2280 = vadd.f32 %v2235, %v2279
    %2281 = vdwg.mxu0
    %v2282 = vadd.f32 %v2257, %v2280
    %v2283 = vld [vmem:[%s7 + $0x2] ss:$0 sm:$0xff]
    %v2284 = vadd.f32 %v2282, %v2283
    %v2285 = vmax.f32 %v2284, 0.0
    %v2286 = vld [vmem:[%s9] sm:$0xff]
    %v2287 = vld [vmem:[%s9 + $0x8] sm:$0xff]
    %v2288 = vld [vmem:[%s9 + $0x10] sm:$0xff]
    %v2289 = vld [vmem:[%s9 + $0x18] sm:$0xff]
    %v2290 = vld [vmem:[%s9 + $0x20] sm:$0xff]
    %v2291 = vld [vmem:[%s9 + $0x28] sm:$0xff]
    %v2292 = vld [vmem:[%s9 + $0x30] sm:$0xff]
    %v2293 = vld [vmem:[%s9 + $0x38] sm:$0xff]
    %v2294 = vld [vmem:[%s9 + $0x40] sm:$0xff]
    %v2295 = vld [vmem:[%s9 + $0x48] sm:$0xff]
    %v2296 = vld [vmem:[%s9 + $0x50] sm:$0xff]
    %v2297 = vld [vmem:[%s9 + $0x58] sm:$0xff]
    %v2298 = vld [vmem:[%s9 + $0x60] sm:$0xf]
    %v2299 = vld [vmem:[%s7 + $0x3] ss:$0 sm:$0xff]
    %vm2300 = vcmask 818176
    %v2302 = vsel %vm2300, %v2285, 0
    %v2305 = vsel %vm1641, %v2298, 0
    %2307 = vmatpush.msra.mxu0 0.0
    %2308 = vmatpush.msra.mxu0 0.0
    %2309 = vmatpush.msra.mxu0 0.0
    %2310 = vmatpush.msra.mxu0 %v2305
    %2311 = vmatpush.msra.mxu0 %v2297
    %2312 = vmatpush.msra.mxu0 %v2296
    %2313 = vmatpush.msra.mxu0 %v2295
    %2314 = vmatpush.msra.mxu0 %v2294
    %2315 = vmatpush.msra.mxu0 %v2293
    %2316 = vmatpush.msra.mxu0 %v2292
    %2317 = vmatpush.msra.mxu0 %v2291
    %2318 = vmatpush.msra.mxu0 %v2290
    %2319 = vmatpush.msra.mxu0 %v2289
    %2320 = vmatpush.msra.mxu0 %v2288
    %2321 = vmatpush.msra.mxu0 %v2287
    %2322 = vmatpush.msra.mxu0 %v2286
    %2323 = vmatmul.f32.gmra.mxu0 %v2302
    %v2324 = vpop.f32.mrf.mxu0
    %v2325 = vadd.f32 %v2299, %v2324
    %2326 = vdwg.mxu0
    %v2327 = vmax.f32 %v2325, 0.0
    %v2328 = vld [vmem:[%s10] sm:$0xff]
    %v2329 = vld [vmem:[%s10 + $0x8] sm:$0xff]
    %v2330 = vld [vmem:[%s10 + $0x10] sm:$0xff]
    %v2331 = vld [vmem:[%s10 + $0x18] sm:$0xff]
    %v2332 = vld [vmem:[%s10 + $0x20] sm:$0xff]
    %v2333 = vld [vmem:[%s10 + $0x28] sm:$0xff]
    %v2334 = vld [vmem:[%s10 + $0x30] sm:$0x3]
    %v2335 = vld [vmem:[%s7 + $0x4] ss:$0 sm:$0xff]
    %vm2336 = vcmask 408576
    %v2338 = vsel %vm2336, %v2327, 0
    %vm2340 = vcmask 1041408
    %v2342 = vsel %vm2340, %v2334, 0
    %2344 = vmatpush.msra.mxu0 0.0
    %2345 = vmatpush.msra.mxu0 0.0
    %2346 = vmatpush.msra.mxu0 0.0
    %2347 = vmatpush.msra.mxu0 0.0
    %2348 = vmatpush.msra.mxu0 0.0
    %2349 = vmatpush.msra.mxu0 0.0
    %2350 = vmatpush.msra.mxu0 0.0
    %2351 = vmatpush.msra.mxu0 0.0
    %2352 = vmatpush.msra.mxu0 0.0
    %2353 = vmatpush.msra.mxu0 %v2342
    %2354 = vmatpush.msra.mxu0 %v2333
    %2355 = vmatpush.msra.mxu0 %v2332
    %2356 = vmatpush.msra.mxu0 %v2331
    %2357 = vmatpush.msra.mxu0 %v2330
    %2358 = vmatpush.msra.mxu0 %v2329
    %2359 = vmatpush.msra.mxu0 %v2328
    %2360 = vmatmul.f32.gmra.mxu0 %v2338
    %v2361 = vpop.f32.mrf.mxu0
    %v2362 = vadd.f32 %v2335, %v2361
    %2363 = vdwg.mxu0
    %vm2364 = vcmask 8192
    %2365 = vst.msk [vmem:[#allocation6] sm:$0x1] %vm2364, %v2362
    // Predicated region
    $region50: #{model_forward.1} parent=1 // pred_check
      _
    $region51: #{model_forward.1} parent=1 // pred_check_branch
      %2367 = sbr.rel (0) target = $region53
    $region52: #{model_forward.1} parent=1 // pred_region
      %2369 = vsyncadd [#allocation5], 0
      %s2371 = sshll.u32 [#allocation6], 4
      %s2372 = int_to_ptr.vmem [resolvable:$true] %s2371
      %s2373 = sshll.u32 %s11, 4
      %s2374 = int_to_ptr.hbm [resolvable:$true] %s2373
      %2376 = dma.vmem_to_hbm [thread:$0]  %s2372, 16, %s2374, [#allocation5]
    $region53: #{model_forward.1} parent=1 // pred_fallthru
      _
    // Predicated region
    $region54: #{model_forward.1} parent=1 // pred_check
      _
    $region55: #{model_forward.1} parent=1 // pred_check_branch
      %2378 = sbr.rel (0) target = $region57
    $region56: #{model_forward.1} parent=1 // pred_region
      %2380 = dma.done [#allocation5], 16
    $region57: #{model_forward.1} parent=1 // pred_fallthru
      _
    %2381 = vsyncpa [#allocation4], 1
    %2382 = vsyncpa [#allocation5], 1

</llo_original>
